<compile_context>
chip_gen: v5e
topology: v5e:2x2
jax: 0.10.0
libtpu: 0.0.40
codegen_flags: <defaults>
</compile_context>

<pallas_src>
import jax
import jax.numpy as jnp
from jax.experimental import pallas as pl
from jax.experimental.pallas import tpu as pltpu

INPUT_DIM = 512
HIDDEN_DIM = 250
HIDDEN_PAD = 256      # hidden dim zero-padded to a lane multiple (250 -> 256)
LATENT_DIM = 40       # left un-padded so LayerNorm stats stay exact
LN_EPS = 1e-5


def _round_up(n, m):
    return (n + m - 1) // m * m


def _ae_kernel(x_ref,
               w1_ref, b1_ref,
               w2_ref, b2_ref,
               ln_g_ref, ln_b_ref,
               w3_ref, b3_ref,
               w4_ref, b4_ref,
               o_ref):
    """One (batch_tile, INPUT_DIM) tile of the autoencoder forward pass."""
    x = x_ref[...]                                              # (tile, 512) bf16

    # ---- encoder ----
    h = jnp.dot(x, w1_ref[...], preferred_element_type=jnp.float32)
    h = jnp.maximum(h + b1_ref[...], 0.0)                       # (tile, 256) f32
    z = jnp.dot(h.astype(jnp.bfloat16), w2_ref[...],
                preferred_element_type=jnp.float32) + b2_ref[...]   # (tile, 40) f32

    # ---- LayerNorm over the (un-padded) latent dim, f32 ----
    mu = jnp.mean(z, axis=-1, keepdims=True)
    zc = z - mu
    var = jnp.mean(zc * zc, axis=-1, keepdims=True)
    zn = zc * jax.lax.rsqrt(var + LN_EPS)
    zn = zn * ln_g_ref[...] + ln_b_ref[...]

    # ---- decoder ----
    d = jnp.dot(zn.astype(jnp.bfloat16), w3_ref[...],
                preferred_element_type=jnp.float32)
    d = jnp.maximum(d + b3_ref[...], 0.0)                       # (tile, 256) f32
    out = jnp.dot(d.astype(jnp.bfloat16), w4_ref[...],
                  preferred_element_type=jnp.float32) + b4_ref[...]  # (tile, 512)

    o_ref[...] = out.astype(o_ref.dtype)


def autoencoder_forward(x, params, *, batch_tile=256):
    """x: (B, INPUT_DIM); params: tuple from init_params(). Returns (B, 512) f32."""
    B, D = x.shape
    assert D == INPUT_DIM

    # --- pick the batch tile (ragged batches handled by zero-padding) ------
    padded8 = _round_up(B, 8)
    tile = _round_up(min(batch_tile, padded8), 8)
    # Keep >= 2 grid steps when the batch allows it, so the "parallel" grid
    # axis can shard across both TensorCores on v7x.
    if padded8 // tile < 2 and padded8 >= 16:
        tile = _round_up(padded8 // 2, 8)
    Bp = _round_up(B, tile)
    grid = Bp // tile

    xb = x.astype(jnp.bfloat16)
    if Bp != B:
        xb = jnp.pad(xb, ((0, Bp - B), (0, 0)))

    x_spec = pl.BlockSpec((tile, INPUT_DIM), lambda i: (i, 0))
    # All parameters fit comfortably in VMEM: block == full array with a
    # constant index map, so they stay resident across grid steps.
    param_specs = [pl.BlockSpec(p.shape, lambda i: (0, 0)) for p in params]
    out_spec = pl.BlockSpec((tile, INPUT_DIM), lambda i: (i, 0))

    param_bytes = sum(int(p.size) * p.dtype.itemsize for p in params)
    flops = 2 * Bp * (INPUT_DIM * HIDDEN_PAD + HIDDEN_PAD * LATENT_DIM
                      + LATENT_DIM * HIDDEN_PAD + HIDDEN_PAD * INPUT_DIM)
    bytes_accessed = Bp * INPUT_DIM * (2 + 4) + param_bytes   # bf16 in, f32 out

    out = pl.pallas_call(
        _ae_kernel,
        out_shape=jax.ShapeDtypeStruct((Bp, INPUT_DIM), jnp.float32),
        grid_spec=pltpu.PrefetchScalarGridSpec(
            num_scalar_prefetch=0,
            grid=(grid,),
            in_specs=[x_spec] + param_specs,
            out_specs=out_spec,
        ),
        compiler_params=pltpu.CompilerParams(
            dimension_semantics=("parallel",),
            # Actual footprint is only a few MB even at batch_tile=512;
            # 32 MiB raises v5e's 16 MiB default and is safe on v7x (64 MiB).
            vmem_limit_bytes=32 * 1024 * 1024,
        ),
        cost_estimate=pl.CostEstimate(
            flops=flops, transcendentals=Bp, bytes_accessed=bytes_accessed),
    )(xb, *params)

    return out[:B] if Bp != B else out


def init_params(key):
    """Parameters matching Autoencoder._init_weights (Linear W ~ N(0,1),
    biases 0, LayerNorm gamma=1 / beta=0), stored in the kernel layout:
    weights as (in, out) bf16 with the hidden dim zero-padded 250 -> 256,
    biases / LayerNorm params as f32 row vectors."""
    k1, k2, k3, k4 = jax.random.split(key, 4)
    w1 = jax.random.normal(k1, (INPUT_DIM, HIDDEN_DIM), jnp.float32)
    w2 = jax.random.normal(k2, (HIDDEN_DIM, LATENT_DIM), jnp.float32)
    w3 = jax.random.normal(k3, (LATENT_DIM, HIDDEN_DIM), jnp.float32)
    w4 = jax.random.normal(k4, (HIDDEN_DIM, INPUT_DIM), jnp.float32)

    pad_h = HIDDEN_PAD - HIDDEN_DIM
    w1p = jnp.pad(w1, ((0, 0), (0, pad_h))).astype(jnp.bfloat16)   # (512, 256)
    w2p = jnp.pad(w2, ((0, pad_h), (0, 0))).astype(jnp.bfloat16)   # (256, 40)
    w3p = jnp.pad(w3, ((0, 0), (0, pad_h))).astype(jnp.bfloat16)   # (40, 256)
    w4p = jnp.pad(w4, ((0, pad_h), (0, 0))).astype(jnp.bfloat16)   # (256, 512)

    b1 = jnp.zeros((1, HIDDEN_PAD), jnp.float32)
    b2 = jnp.zeros((1, LATENT_DIM), jnp.float32)
    b3 = jnp.zeros((1, HIDDEN_PAD), jnp.float32)
    b4 = jnp.zeros((1, INPUT_DIM), jnp.float32)
    ln_g = jnp.ones((1, LATENT_DIM), jnp.float32)
    ln_b = jnp.zeros((1, LATENT_DIM), jnp.float32)
    return (w1p, b1, w2p, b2, ln_g, ln_b, w3p, b3, w4p, b4)


def reference_forward(x, params):
    """Pure-JAX reference using the same (padded, bf16) parameters / casts."""
    w1, b1, w2, b2, ln_g, ln_b, w3, b3, w4, b4 = params
    xb = x.astype(jnp.bfloat16)
    h = jnp.maximum(
        jnp.dot(xb, w1, preferred_element_type=jnp.float32) + b1, 0.0)
    z = jnp.dot(h.astype(jnp.bfloat16), w2,
                preferred_element_type=jnp.float32) + b2
    mu = jnp.mean(z, axis=-1, keepdims=True)
    var = jnp.mean((z - mu) ** 2, axis=-1, keepdims=True)
    zn = (z - mu) * jax.lax.rsqrt(var + LN_EPS) * ln_g + ln_b
    d = jnp.maximum(
        jnp.dot(zn.astype(jnp.bfloat16), w3,
                preferred_element_type=jnp.float32) + b3, 0.0)
    return jnp.dot(d.astype(jnp.bfloat16), w4,
                   preferred_element_type=jnp.float32) + b4


if __name__ == "__main__":
    key = jax.random.PRNGKey(0)
    k_param, k_x = jax.random.split(key)

    params = init_params(k_param)
    batch = 50                      # deliberately ragged: exercises padding + a 2-step grid
    x = jax.random.normal(k_x, (batch, INPUT_DIM), jnp.float32)

    out = autoencoder_forward(x, params, batch_tile=256)
    out = jax.block_until_ready(out)

    ref = reference_forward(x, params)
    assert out.shape == (batch, INPUT_DIM)
    assert bool(jnp.all(jnp.isfinite(out))), "non-finite output"
    assert jnp.allclose(out, ref, rtol=1e-2, atol=1e-1), "mismatch vs reference"

    print("KERNEL_OK")
</pallas_src>

<mosaic_0001>
module attributes {stable_mosaic.version = 11 : i64} {
  func.func @_ae_kernel(%arg0: i32, %arg1: memref<32x512xbf16, #tpu.memory_space<vmem>>, %arg2: memref<512x256xbf16, #tpu.memory_space<vmem>>, %arg3: memref<1x256xf32, #tpu.memory_space<vmem>>, %arg4: memref<256x40xbf16, #tpu.memory_space<vmem>>, %arg5: memref<1x40xf32, #tpu.memory_space<vmem>>, %arg6: memref<1x40xf32, #tpu.memory_space<vmem>>, %arg7: memref<1x40xf32, #tpu.memory_space<vmem>>, %arg8: memref<40x256xbf16, #tpu.memory_space<vmem>>, %arg9: memref<1x256xf32, #tpu.memory_space<vmem>>, %arg10: memref<256x512xbf16, #tpu.memory_space<vmem>>, %arg11: memref<1x512xf32, #tpu.memory_space<vmem>>, %arg12: memref<32x512xf32, #tpu.memory_space<vmem>>) attributes {dimension_semantics = [#tpu.dimension_semantics<parallel>], iteration_bounds = array<i64: 2>, scalar_prefetch = 0 : i64, scratch_operands = 0 : i64, tpu.core_type = #tpu.core_type<tc>, window_params = [{transform_indices = @transform_0, window_bounds = array<i64: 32, 512>}, {pipeline_mode = #tpu.pipeline_mode<synchronous>, transform_indices = @transform_1, window_bounds = array<i64: 512, 256>}, {pipeline_mode = #tpu.pipeline_mode<synchronous>, transform_indices = @transform_2, window_bounds = array<i64: 1, 256>}, {pipeline_mode = #tpu.pipeline_mode<synchronous>, transform_indices = @transform_3, window_bounds = array<i64: 256, 40>}, {pipeline_mode = #tpu.pipeline_mode<synchronous>, transform_indices = @transform_4, window_bounds = array<i64: 1, 40>}, {pipeline_mode = #tpu.pipeline_mode<synchronous>, transform_indices = @transform_5, window_bounds = array<i64: 1, 40>}, {pipeline_mode = #tpu.pipeline_mode<synchronous>, transform_indices = @transform_6, window_bounds = array<i64: 1, 40>}, {pipeline_mode = #tpu.pipeline_mode<synchronous>, transform_indices = @transform_7, window_bounds = array<i64: 40, 256>}, {pipeline_mode = #tpu.pipeline_mode<synchronous>, transform_indices = @transform_8, window_bounds = array<i64: 1, 256>}, {pipeline_mode = #tpu.pipeline_mode<synchronous>, transform_indices = @transform_9, window_bounds = array<i64: 256, 512>}, {pipeline_mode = #tpu.pipeline_mode<synchronous>, transform_indices = @transform_10, window_bounds = array<i64: 1, 512>}, {transform_indices = @transform_11, window_bounds = array<i64: 32, 512>}]} {
    %c0 = arith.constant 0 : index
    %c0_0 = arith.constant 0 : index
    %0 = vector.load %arg1[%c0, %c0_0] : memref<32x512xbf16, #tpu.memory_space<vmem>>, vector<32x512xbf16>
    %c0_1 = arith.constant 0 : index
    %c0_2 = arith.constant 0 : index
    %1 = vector.load %arg2[%c0_1, %c0_2] : memref<512x256xbf16, #tpu.memory_space<vmem>>, vector<512x256xbf16>
    %cst = arith.constant dense<0.000000e+00> : vector<32x256xf32>
    %2 = tpu.matmul %0, %1, %cst {dimension_numbers = #tpu.dot_dimension_numbers<[1], [0], [0], [1], [0, 0, 1, 1], [], []>} : vector<32x512xbf16>, vector<512x256xbf16>, vector<32x256xf32> -> vector<32x256xf32>
    %c0_3 = arith.constant 0 : index
    %c0_4 = arith.constant 0 : index
    %3 = vector.load %arg3[%c0_3, %c0_4] : memref<1x256xf32, #tpu.memory_space<vmem>>, vector<1x256xf32>
    %4 = vector.broadcast %3 : vector<1x256xf32> to vector<32x256xf32>
    %5 = arith.addf %2, %4 : vector<32x256xf32>
    %cst_5 = arith.constant 0.000000e+00 : f32
    %6 = vector.broadcast %cst_5 : f32 to vector<32x256xf32>
    %7 = arith.maximumf %5, %6 : vector<32x256xf32>
    %8 = arith.truncf %7 : vector<32x256xf32> to vector<32x256xbf16>
    %c0_6 = arith.constant 0 : index
    %c0_7 = arith.constant 0 : index
    %9 = vector.load %arg4[%c0_6, %c0_7] : memref<256x40xbf16, #tpu.memory_space<vmem>>, vector<256x40xbf16>
    %cst_8 = arith.constant dense<0.000000e+00> : vector<32x40xf32>
    %10 = tpu.matmul %8, %9, %cst_8 {dimension_numbers = #tpu.dot_dimension_numbers<[1], [0], [0], [1], [0, 0, 1, 1], [], []>} : vector<32x256xbf16>, vector<256x40xbf16>, vector<32x40xf32> -> vector<32x40xf32>
    %c0_9 = arith.constant 0 : index
    %c0_10 = arith.constant 0 : index
    %11 = vector.load %arg5[%c0_9, %c0_10] : memref<1x40xf32, #tpu.memory_space<vmem>>, vector<1x40xf32>
    %12 = vector.broadcast %11 : vector<1x40xf32> to vector<32x40xf32>
    %13 = arith.addf %10, %12 : vector<32x40xf32>
    %cst_11 = arith.constant dense<0.000000e+00> : vector<32xf32>
    %14 = vector.multi_reduction <add>, %13, %cst_11 [1] : vector<32x40xf32> to vector<32xf32>
    %15 = vector.shape_cast %14 : vector<32xf32> to vector<32x1xf32>
    %cst_12 = arith.constant 4.000000e+01 : f32
    %16 = vector.broadcast %cst_12 : f32 to vector<32x1xf32>
    %17 = arith.divf %15, %16 : vector<32x1xf32>
    %18 = vector.broadcast %17 : vector<32x1xf32> to vector<32x40xf32>
    %19 = arith.subf %13, %18 : vector<32x40xf32>
    %20 = arith.mulf %19, %19 : vector<32x40xf32>
    %cst_13 = arith.constant dense<0.000000e+00> : vector<32xf32>
    %21 = vector.multi_reduction <add>, %20, %cst_13 [1] : vector<32x40xf32> to vector<32xf32>
    %22 = vector.shape_cast %21 : vector<32xf32> to vector<32x1xf32>
    %cst_14 = arith.constant 4.000000e+01 : f32
    %23 = vector.broadcast %cst_14 : f32 to vector<32x1xf32>
    %24 = arith.divf %22, %23 : vector<32x1xf32>
    %cst_15 = arith.constant 9.99999974E-6 : f32
    %25 = vector.broadcast %cst_15 : f32 to vector<32x1xf32>
    %26 = arith.addf %24, %25 : vector<32x1xf32>
    %27 = math.rsqrt %26 : vector<32x1xf32>
    %28 = vector.broadcast %27 : vector<32x1xf32> to vector<32x40xf32>
    %29 = arith.mulf %19, %28 : vector<32x40xf32>
    %c0_16 = arith.constant 0 : index
    %c0_17 = arith.constant 0 : index
    %30 = vector.load %arg6[%c0_16, %c0_17] : memref<1x40xf32, #tpu.memory_space<vmem>>, vector<1x40xf32>
    %31 = vector.broadcast %30 : vector<1x40xf32> to vector<32x40xf32>
    %32 = arith.mulf %29, %31 : vector<32x40xf32>
    %c0_18 = arith.constant 0 : index
    %c0_19 = arith.constant 0 : index
    %33 = vector.load %arg7[%c0_18, %c0_19] : memref<1x40xf32, #tpu.memory_space<vmem>>, vector<1x40xf32>
    %34 = vector.broadcast %33 : vector<1x40xf32> to vector<32x40xf32>
    %35 = arith.addf %32, %34 : vector<32x40xf32>
    %36 = arith.truncf %35 : vector<32x40xf32> to vector<32x40xbf16>
    %c0_20 = arith.constant 0 : index
    %c0_21 = arith.constant 0 : index
    %37 = vector.load %arg8[%c0_20, %c0_21] : memref<40x256xbf16, #tpu.memory_space<vmem>>, vector<40x256xbf16>
    %cst_22 = arith.constant dense<0.000000e+00> : vector<32x256xf32>
    %38 = tpu.matmul %36, %37, %cst_22 {dimension_numbers = #tpu.dot_dimension_numbers<[1], [0], [0], [1], [0, 0, 1, 1], [], []>} : vector<32x40xbf16>, vector<40x256xbf16>, vector<32x256xf32> -> vector<32x256xf32>
    %c0_23 = arith.constant 0 : index
    %c0_24 = arith.constant 0 : index
    %39 = vector.load %arg9[%c0_23, %c0_24] : memref<1x256xf32, #tpu.memory_space<vmem>>, vector<1x256xf32>
    %40 = vector.broadcast %39 : vector<1x256xf32> to vector<32x256xf32>
    %41 = arith.addf %38, %40 : vector<32x256xf32>
    %cst_25 = arith.constant 0.000000e+00 : f32
    %42 = vector.broadcast %cst_25 : f32 to vector<32x256xf32>
    %43 = arith.maximumf %41, %42 : vector<32x256xf32>
    %44 = arith.truncf %43 : vector<32x256xf32> to vector<32x256xbf16>
    %c0_26 = arith.constant 0 : index
    %c0_27 = arith.constant 0 : index
    %45 = vector.load %arg10[%c0_26, %c0_27] : memref<256x512xbf16, #tpu.memory_space<vmem>>, vector<256x512xbf16>
    %cst_28 = arith.constant dense<0.000000e+00> : vector<32x512xf32>
    %46 = tpu.matmul %44, %45, %cst_28 {dimension_numbers = #tpu.dot_dimension_numbers<[1], [0], [0], [1], [0, 0, 1, 1], [], []>} : vector<32x256xbf16>, vector<256x512xbf16>, vector<32x512xf32> -> vector<32x512xf32>
    %c0_29 = arith.constant 0 : index
    %c0_30 = arith.constant 0 : index
    %47 = vector.load %arg11[%c0_29, %c0_30] : memref<1x512xf32, #tpu.memory_space<vmem>>, vector<1x512xf32>
    %48 = vector.broadcast %47 : vector<1x512xf32> to vector<32x512xf32>
    %49 = arith.addf %46, %48 : vector<32x512xf32>
    %c0_31 = arith.constant 0 : index
    %c0_32 = arith.constant 0 : index
    %50 = vector.load %arg12[%c0_31, %c0_32] : memref<32x512xf32, #tpu.memory_space<vmem>>, vector<32x512xf32>
    tpu.vector_store %arg12[%c0_31, %c0_32], %49 {strides = array<i32>} : memref<32x512xf32, #tpu.memory_space<vmem>>, vector<32x512xf32>,
    return
  }
  func.func @transform_0(%arg0: i32) -> (i32, i32) {
    %c0_i32 = arith.constant 0 : i32
    %c0_i32_0 = arith.constant 0 : i32
    return %arg0, %c0_i32 : i32, i32
  }
  func.func @transform_1(%arg0: i32) -> (i32, i32) {
    %c0_i32 = arith.constant 0 : i32
    %c0_i32_0 = arith.constant 0 : i32
    %c0_i32_1 = arith.constant 0 : i32
    return %c0_i32, %c0_i32_0 : i32, i32
  }
  func.func @transform_2(%arg0: i32) -> (i32, i32) {
    %c0_i32 = arith.constant 0 : i32
    %c0_i32_0 = arith.constant 0 : i32
    %c0_i32_1 = arith.constant 0 : i32
    return %c0_i32, %c0_i32_0 : i32, i32
  }
  func.func @transform_3(%arg0: i32) -> (i32, i32) {
    %c0_i32 = arith.constant 0 : i32
    %c0_i32_0 = arith.constant 0 : i32
    %c0_i32_1 = arith.constant 0 : i32
    return %c0_i32, %c0_i32_0 : i32, i32
  }
  func.func @transform_4(%arg0: i32) -> (i32, i32) {
    %c0_i32 = arith.constant 0 : i32
    %c0_i32_0 = arith.constant 0 : i32
    %c0_i32_1 = arith.constant 0 : i32
    return %c0_i32, %c0_i32_0 : i32, i32
  }
  func.func @transform_5(%arg0: i32) -> (i32, i32) {
    %c0_i32 = arith.constant 0 : i32
    %c0_i32_0 = arith.constant 0 : i32
    %c0_i32_1 = arith.constant 0 : i32
    return %c0_i32, %c0_i32_0 : i32, i32
  }
  func.func @transform_6(%arg0: i32) -> (i32, i32) {
    %c0_i32 = arith.constant 0 : i32
    %c0_i32_0 = arith.constant 0 : i32
    %c0_i32_1 = arith.constant 0 : i32
    return %c0_i32, %c0_i32_0 : i32, i32
  }
  func.func @transform_7(%arg0: i32) -> (i32, i32) {
    %c0_i32 = arith.constant 0 : i32
    %c0_i32_0 = arith.constant 0 : i32
    %c0_i32_1 = arith.constant 0 : i32
    return %c0_i32, %c0_i32_0 : i32, i32
  }
  func.func @transform_8(%arg0: i32) -> (i32, i32) {
    %c0_i32 = arith.constant 0 : i32
    %c0_i32_0 = arith.constant 0 : i32
    %c0_i32_1 = arith.constant 0 : i32
    return %c0_i32, %c0_i32_0 : i32, i32
  }
  func.func @transform_9(%arg0: i32) -> (i32, i32) {
    %c0_i32 = arith.constant 0 : i32
    %c0_i32_0 = arith.constant 0 : i32
    %c0_i32_1 = arith.constant 0 : i32
    return %c0_i32, %c0_i32_0 : i32, i32
  }
  func.func @transform_10(%arg0: i32) -> (i32, i32) {
    %c0_i32 = arith.constant 0 : i32
    %c0_i32_0 = arith.constant 0 : i32
    %c0_i32_1 = arith.constant 0 : i32
    return %c0_i32, %c0_i32_0 : i32, i32
  }
  func.func @transform_11(%arg0: i32) -> (i32, i32) {
    %c0_i32 = arith.constant 0 : i32
    %c0_i32_0 = arith.constant 0 : i32
    return %arg0, %c0_i32 : i32, i32
  }
}

</mosaic_0001>

<llo_original>
// kernel: tpu_custom_call.1
$region0: #{tpu_custom_call.1}
  #allocation0 [shape = 'u32[]', space=smem, size = 0x4, offset = 0x4, fixed_abs, tag = 'smem constant byte address 0x4 - core index']
  #allocation1 [shape = 'u32[72,128]{1,0:T(1,128)}', space=vmem, size = 0x9000, scoped, tag = 'internal scratch']
  %s0 = inlined_call_operand.vmem [shape: bf16[64,512], index: 0, kind: input, shape index: {}]
  %s1 = inlined_call_operand.hbm [shape: bf16[512,256], index: 1, kind: input, shape index: {}]
  %s2 = inlined_call_operand.hbm [shape: f32[1,256], index: 2, kind: input, shape index: {}]
  %s3 = inlined_call_operand.vmem [shape: bf16[256,40], index: 3, kind: input, shape index: {}]
  %s4 = inlined_call_operand.vmem [shape: f32[1,40], index: 4, kind: input, shape index: {}]
  %s5 = inlined_call_operand.hbm [shape: f32[1,40], index: 5, kind: input, shape index: {}]
  %s6 = inlined_call_operand.hbm [shape: f32[1,40], index: 6, kind: input, shape index: {}]
  %s7 = inlined_call_operand.vmem [shape: bf16[40,256], index: 7, kind: input, shape index: {}]
  %s8 = inlined_call_operand.vmem [shape: f32[1,256], index: 8, kind: input, shape index: {}]
  %s9 = inlined_call_operand.hbm [shape: bf16[256,512], index: 9, kind: input, shape index: {}]
  %s10 = inlined_call_operand.vmem [shape: f32[1,512], index: 10, kind: input, shape index: {}]
  %s11 = inlined_call_operand.hbm [shape: f32[64,512], index: 11, kind: output, shape index: {}]
  %s12 = sld [smem:[#allocation0]]
  $region97: #{tpu_custom_call.1} parent=0
    _
  %s14 = ssub.s32 1, %s12
  %s15 = scalar_select 0, %s14, %s12
  $region1: #{tpu_custom_call.1} parent=0
    #allocation2 [shape = 'u8[262144]{0}', space=vmem, size = 0x40000, scoped, tag = 'input window, operand 1, single buffered']
    #allocation3 [shape = 's32[2]{0}', space=sflag, size = 0x8, scoped, tag = 'scoped memory for tpu_custom_call.1']
    #allocation4 [shape = 's32[2]{0}', space=sflag, size = 0x8, scoped, tag = 'scoped memory for tpu_custom_call.1']
    #allocation5 [shape = 'u8[1024]{0}', space=vmem, size = 0x400, scoped, tag = 'input window, operand 2, single buffered']
    #allocation6 [shape = 's32[1]{0}', space=sflag, size = 0x4, scoped, tag = 'scoped memory for tpu_custom_call.1']
    #allocation7 [shape = 'u8[512]{0}', space=vmem, size = 0x400, scoped, tag = 'input window, operand 5, single buffered']
    #allocation8 [shape = 'u8[512]{0}', space=vmem, size = 0x400, scoped, tag = 'input window, operand 6, single buffered']
    #allocation9 [shape = 's32[1]{0}', space=sflag, size = 0x4, scoped, tag = 'scoped memory for tpu_custom_call.1']
    #allocation10 [shape = 'u8[262144]{0}', space=vmem, size = 0x40000, scoped, tag = 'input window, operand 9, single buffered']
    #allocation11 [shape = 'u8[131072]{0}', space=vmem, size = 0x20000, scoped, tag = 'output window, operand 0']
    %16 = vsyncpa [#allocation3], 0
    %17 = vsyncpa [#allocation6], 0
    %18 = vsyncpa [#allocation9], 0
    %19 = vsyncpa [#allocation4], 0
    %s20 = scalar_lea.sflag [#allocation4], 1
    %21 = vsyncpa %s20, 0
    loop: start=0, step=1, limit=4
    $region2: #{tpu_custom_call.1} parent=1 // loop_pre_header
      _
    $region3: #{tpu_custom_call.1} parent=1 // loop_header
      %s23 = sphi 0, %s27
      %p24 = scmp.ge.s32.totalorder %s23, 4
      %s33 = sphi 0, %s35
      %s36 = sphi 0, %s33
      %s37 = sphi 0, %s36
      %s53 = sphi 0, %s37
      %s57 = sphi 0, %s57
      %s59 = sphi 0, %s57
      %s60 = sphi 0, %s59
      %s74 = sphi 0, %s60
      %s78 = sphi 0, %s78
      %s80 = sphi 0, %s78
      %s81 = sphi 0, %s80
      %s95 = sphi 0, %s81
      %s99 = sphi 0, %s99
      %s101 = sphi 0, %s99
      %s102 = sphi 0, %s101
      %s116 = sphi 0, %s102
      %s120 = sphi 0, %s120
      %s122 = sphi 0, %s120
      %s123 = sphi 0, %s122
      %s137 = sphi 0, %s123
      %s141 = sphi 0, %s141
      %s143 = sphi 0, %s141
      %s144 = sphi 0, %s143
      %s158 = sphi 0, %s144
      %s162 = sphi 0, %s162
      %s164 = sphi 0, %s162
      %s165 = sphi 0, %s164
      %s179 = sphi 0, %s165
      %s183 = sphi 0, %s183
      %s185 = sphi 0, %s183
      %s186 = sphi 0, %s185
      %s200 = sphi 0, %s186
      %s204 = sphi 0, %s204
      %s206 = sphi 0, %s204
      %s207 = sphi 0, %s206
      %s221 = sphi 0, %s207
      %s225 = sphi 0, %s225
      %s227 = sphi 0, %s225
      %s228 = sphi 0, %s227
      %s242 = sphi 0, %s228
      %s246 = sphi 0, %s246
      %s248 = sphi 0, %s246
      %s249 = sphi 0, %s248
      %s263 = sphi 0, %s249
      %s269 = sphi 0, %s271
      %s272 = sphi 0, %s269
      %s273 = sphi 0, %s272
      %s289 = sphi 0, %s273
    $region4: #{tpu_custom_call.1} parent=1 // loop_header_branch
      %26 = sbr.rel (%p24) target = $region8
    $region5: #{tpu_custom_call.1} parent=1 // loop_body
      %s28 = ssub.s32 %s23, 1
      %s29 = ssub.s32 %s23, 2
      %s30 = sadd.s32 %s23, 1
      %s31 = ssub.s32 %s23, %s30
      %p32 = scmp.eq.s32.totalorder %s31, 0
      %s34 = sadd.s32 %s33, 1
      %s35 = scalar_select %p32, %s33, %s34
      %p38 = pneg %p32
      %p39 = scmp.eq.s32.totalorder %s23, 1
      %p40 = por %p38, %p39
      %p41 = scmp.ne.s32.totalorder %s33, %s36
      %p42 = scmp.eq.s32.totalorder %s23, 0
      %p43 = por %p41, %p42
      %p44 = scmp.ne.s32.totalorder %s33, %s36
      %p45 = scmp.eq.s32.totalorder %s28, 1
      %p46 = por %p44, %p45
      %p47 = scmp.ne.s32.totalorder %s36, %s37
      %p48 = scmp.eq.s32.totalorder %s28, 0
      %p49 = por %p47, %p48
      %p50 = scmp.ne.s32.totalorder %s36, %s37
      %p51 = scmp.eq.s32.totalorder %s29, 1
      %p52 = por %p50, %p51
      %p54 = scmp.ne.s32.totalorder %s37, %s53
      %p55 = scmp.eq.s32.totalorder %s29, 0
      %p56 = por %p54, %p55
      %s58 = sadd.s32 %s57, 1
      %p61 = scmp.eq.s32.totalorder %s23, 1
      %p62 = scmp.ne.s32.totalorder %s57, %s59
      %p63 = scmp.eq.s32.totalorder %s23, 0
      %p64 = por %p62, %p63
      %p65 = scmp.ne.s32.totalorder %s57, %s59
      %p66 = scmp.eq.s32.totalorder %s28, 1
      %p67 = por %p65, %p66
      %p68 = scmp.ne.s32.totalorder %s59, %s60
      %p69 = scmp.eq.s32.totalorder %s28, 0
      %p70 = por %p68, %p69
      %p71 = scmp.ne.s32.totalorder %s59, %s60
      %p72 = scmp.eq.s32.totalorder %s29, 1
      %p73 = por %p71, %p72
      %p75 = scmp.ne.s32.totalorder %s60, %s74
      %p76 = scmp.eq.s32.totalorder %s29, 0
      %p77 = por %p75, %p76
      %s79 = sadd.s32 %s78, 1
      %p82 = scmp.eq.s32.totalorder %s23, 1
      %p83 = scmp.ne.s32.totalorder %s78, %s80
      %p84 = scmp.eq.s32.totalorder %s23, 0
      %p85 = por %p83, %p84
      %p86 = scmp.ne.s32.totalorder %s78, %s80
      %p87 = scmp.eq.s32.totalorder %s28, 1
      %p88 = por %p86, %p87
      %p89 = scmp.ne.s32.totalorder %s80, %s81
      %p90 = scmp.eq.s32.totalorder %s28, 0
      %p91 = por %p89, %p90
      %p92 = scmp.ne.s32.totalorder %s80, %s81
      %p93 = scmp.eq.s32.totalorder %s29, 1
      %p94 = por %p92, %p93
      %p96 = scmp.ne.s32.totalorder %s81, %s95
      %p97 = scmp.eq.s32.totalorder %s29, 0
      %p98 = por %p96, %p97
      %s100 = sadd.s32 %s99, 1
      %p103 = scmp.eq.s32.totalorder %s23, 1
      %p104 = scmp.ne.s32.totalorder %s99, %s101
      %p105 = scmp.eq.s32.totalorder %s23, 0
      %p106 = por %p104, %p105
      %p107 = scmp.ne.s32.totalorder %s99, %s101
      %p108 = scmp.eq.s32.totalorder %s28, 1
      %p109 = por %p107, %p108
      %p110 = scmp.ne.s32.totalorder %s101, %s102
      %p111 = scmp.eq.s32.totalorder %s28, 0
      %p112 = por %p110, %p111
      %p113 = scmp.ne.s32.totalorder %s101, %s102
      %p114 = scmp.eq.s32.totalorder %s29, 1
      %p115 = por %p113, %p114
      %p117 = scmp.ne.s32.totalorder %s102, %s116
      %p118 = scmp.eq.s32.totalorder %s29, 0
      %p119 = por %p117, %p118
      %s121 = sadd.s32 %s120, 1
      %p124 = scmp.eq.s32.totalorder %s23, 1
      %p125 = scmp.ne.s32.totalorder %s120, %s122
      %p126 = scmp.eq.s32.totalorder %s23, 0
      %p127 = por %p125, %p126
      %p128 = scmp.ne.s32.totalorder %s120, %s122
      %p129 = scmp.eq.s32.totalorder %s28, 1
      %p130 = por %p128, %p129
      %p131 = scmp.ne.s32.totalorder %s122, %s123
      %p132 = scmp.eq.s32.totalorder %s28, 0
      %p133 = por %p131, %p132
      %p134 = scmp.ne.s32.totalorder %s122, %s123
      %p135 = scmp.eq.s32.totalorder %s29, 1
      %p136 = por %p134, %p135
      %p138 = scmp.ne.s32.totalorder %s123, %s137
      %p139 = scmp.eq.s32.totalorder %s29, 0
      %p140 = por %p138, %p139
      %s142 = sadd.s32 %s141, 1
      %p145 = scmp.eq.s32.totalorder %s23, 1
      %p146 = scmp.ne.s32.totalorder %s141, %s143
      %p147 = scmp.eq.s32.totalorder %s23, 0
      %p148 = por %p146, %p147
      %p149 = scmp.ne.s32.totalorder %s141, %s143
      %p150 = scmp.eq.s32.totalorder %s28, 1
      %p151 = por %p149, %p150
      %p152 = scmp.ne.s32.totalorder %s143, %s144
      %p153 = scmp.eq.s32.totalorder %s28, 0
      %p154 = por %p152, %p153
      %p155 = scmp.ne.s32.totalorder %s143, %s144
      %p156 = scmp.eq.s32.totalorder %s29, 1
      %p157 = por %p155, %p156
      %p159 = scmp.ne.s32.totalorder %s144, %s158
      %p160 = scmp.eq.s32.totalorder %s29, 0
      %p161 = por %p159, %p160
      %s163 = sadd.s32 %s162, 1
      %p166 = scmp.eq.s32.totalorder %s23, 1
      %p167 = scmp.ne.s32.totalorder %s162, %s164
      %p168 = scmp.eq.s32.totalorder %s23, 0
      %p169 = por %p167, %p168
      %p170 = scmp.ne.s32.totalorder %s162, %s164
      %p171 = scmp.eq.s32.totalorder %s28, 1
      %p172 = por %p170, %p171
      %p173 = scmp.ne.s32.totalorder %s164, %s165
      %p174 = scmp.eq.s32.totalorder %s28, 0
      %p175 = por %p173, %p174
      %p176 = scmp.ne.s32.totalorder %s164, %s165
      %p177 = scmp.eq.s32.totalorder %s29, 1
      %p178 = por %p176, %p177
      %p180 = scmp.ne.s32.totalorder %s165, %s179
      %p181 = scmp.eq.s32.totalorder %s29, 0
      %p182 = por %p180, %p181
      %s184 = sadd.s32 %s183, 1
      %p187 = scmp.eq.s32.totalorder %s23, 1
      %p188 = scmp.ne.s32.totalorder %s183, %s185
      %p189 = scmp.eq.s32.totalorder %s23, 0
      %p190 = por %p188, %p189
      %p191 = scmp.ne.s32.totalorder %s183, %s185
      %p192 = scmp.eq.s32.totalorder %s28, 1
      %p193 = por %p191, %p192
      %p194 = scmp.ne.s32.totalorder %s185, %s186
      %p195 = scmp.eq.s32.totalorder %s28, 0
      %p196 = por %p194, %p195
      %p197 = scmp.ne.s32.totalorder %s185, %s186
      %p198 = scmp.eq.s32.totalorder %s29, 1
      %p199 = por %p197, %p198
      %p201 = scmp.ne.s32.totalorder %s186, %s200
      %p202 = scmp.eq.s32.totalorder %s29, 0
      %p203 = por %p201, %p202
      %s205 = sadd.s32 %s204, 1
      %p208 = scmp.eq.s32.totalorder %s23, 1
      %p209 = scmp.ne.s32.totalorder %s204, %s206
      %p210 = scmp.eq.s32.totalorder %s23, 0
      %p211 = por %p209, %p210
      %p212 = scmp.ne.s32.totalorder %s204, %s206
      %p213 = scmp.eq.s32.totalorder %s28, 1
      %p214 = por %p212, %p213
      %p215 = scmp.ne.s32.totalorder %s206, %s207
      %p216 = scmp.eq.s32.totalorder %s28, 0
      %p217 = por %p215, %p216
      %p218 = scmp.ne.s32.totalorder %s206, %s207
      %p219 = scmp.eq.s32.totalorder %s29, 1
      %p220 = por %p218, %p219
      %p222 = scmp.ne.s32.totalorder %s207, %s221
      %p223 = scmp.eq.s32.totalorder %s29, 0
      %p224 = por %p222, %p223
      %s226 = sadd.s32 %s225, 1
      %p229 = scmp.eq.s32.totalorder %s23, 1
      %p230 = scmp.ne.s32.totalorder %s225, %s227
      %p231 = scmp.eq.s32.totalorder %s23, 0
      %p232 = por %p230, %p231
      %p233 = scmp.ne.s32.totalorder %s225, %s227
      %p234 = scmp.eq.s32.totalorder %s28, 1
      %p235 = por %p233, %p234
      %p236 = scmp.ne.s32.totalorder %s227, %s228
      %p237 = scmp.eq.s32.totalorder %s28, 0
      %p238 = por %p236, %p237
      %p239 = scmp.ne.s32.totalorder %s227, %s228
      %p240 = scmp.eq.s32.totalorder %s29, 1
      %p241 = por %p239, %p240
      %p243 = scmp.ne.s32.totalorder %s228, %s242
      %p244 = scmp.eq.s32.totalorder %s29, 0
      %p245 = por %p243, %p244
      %s247 = sadd.s32 %s246, 1
      %p250 = scmp.eq.s32.totalorder %s23, 1
      %p251 = scmp.ne.s32.totalorder %s246, %s248
      %p252 = scmp.eq.s32.totalorder %s23, 0
      %p253 = por %p251, %p252
      %p254 = scmp.ne.s32.totalorder %s246, %s248
      %p255 = scmp.eq.s32.totalorder %s28, 1
      %p256 = por %p254, %p255
      %p257 = scmp.ne.s32.totalorder %s248, %s249
      %p258 = scmp.eq.s32.totalorder %s28, 0
      %p259 = por %p257, %p258
      %p260 = scmp.ne.s32.totalorder %s248, %s249
      %p261 = scmp.eq.s32.totalorder %s29, 1
      %p262 = por %p260, %p261
      %p264 = scmp.ne.s32.totalorder %s249, %s263
      %p265 = scmp.eq.s32.totalorder %s29, 0
      %p266 = por %p264, %p265
      %s267 = ssub.s32 %s23, %s30
      %p268 = scmp.eq.s32.totalorder %s267, 0
      %s270 = sadd.s32 %s269, 1
      %s271 = scalar_select %p268, %s269, %s270
      %p274 = pneg %p268
      %p275 = scmp.eq.s32.totalorder %s23, 1
      %p276 = por %p274, %p275
      %p277 = scmp.ne.s32.totalorder %s269, %s272
      %p278 = scmp.eq.s32.totalorder %s23, 0
      %p279 = por %p277, %p278
      %p280 = scmp.ne.s32.totalorder %s269, %s272
      %p281 = scmp.eq.s32.totalorder %s28, 1
      %p282 = por %p280, %p281
      %p283 = scmp.ne.s32.totalorder %s272, %s273
      %p284 = scmp.eq.s32.totalorder %s28, 0
      %p285 = por %p283, %p284
      %p286 = scmp.ne.s32.totalorder %s272, %s273
      %p287 = scmp.eq.s32.totalorder %s29, 1
      %p288 = por %p286, %p287
      %p290 = scmp.ne.s32.totalorder %s273, %s289
      %p291 = scmp.eq.s32.totalorder %s29, 0
      %p292 = por %p290, %p291
      %p293 = scmp.le.s32.totalorder 1, %s23
      %p294 = scmp.lt.s32.totalorder %s23, 3
      %p295 = pnand %p293, %p294
      %p296 = pneg %p295
      // Predicated region
      $region9: #{tpu_custom_call.1} parent=5 // pred_check
        _
      $region10: #{tpu_custom_call.1} parent=5 // pred_check_branch
        %298 = sbr.rel (%p295) target = $region12
      $region11: #{tpu_custom_call.1} parent=5 // pred_region
        %s299 = ssub.s32 %s23, 1
        // Predicated region
        $region13: #{tpu_custom_call.1} parent=11 // pred_check
          %p300 = pneg %p70
        $region14: #{tpu_custom_call.1} parent=11 // pred_check_branch
          %302 = sbr.rel (%p300) target = $region16
        $region15: #{tpu_custom_call.1} parent=11 // pred_region
          %304 = vsyncadd [#allocation3], 0
          %s305 = sshll.u32 %s1, 4
          %s306 = int_to_ptr.hbm [resolvable:$true] %s305
          %s307 = sshll.u32 [#allocation2], 4
          %s308 = int_to_ptr.vmem [resolvable:$true] %s307
          %313 = dma.hbm_to_vmem [thread:$0]  %s306, 8192, %s308, [#allocation3], 128, 128, 8
        $region16: #{tpu_custom_call.1} parent=11 // pred_fallthru
          _
        // Predicated region
        $region17: #{tpu_custom_call.1} parent=11 // pred_check
          %p314 = pneg %p91
        $region18: #{tpu_custom_call.1} parent=11 // pred_check_branch
          %316 = sbr.rel (%p314) target = $region20
        $region19: #{tpu_custom_call.1} parent=11 // pred_region
          %318 = vsyncadd [#allocation6], 0
          %s320 = sshll.u32 %s2, 4
          %s321 = int_to_ptr.hbm [resolvable:$true] %s320
          %s322 = sshll.u32 [#allocation5], 4
          %s323 = int_to_ptr.vmem [resolvable:$true] %s322
          %325 = dma.hbm_to_vmem [thread:$0]  %s321, 32, %s323, [#allocation6]
        $region20: #{tpu_custom_call.1} parent=11 // pred_fallthru
          _
        // Predicated region
        $region21: #{tpu_custom_call.1} parent=11 // pred_check
          %p326 = pneg %p112
        $region22: #{tpu_custom_call.1} parent=11 // pred_check_branch
          %328 = sbr.rel (%p326) target = $region24
        $region23: #{tpu_custom_call.1} parent=11 // pred_region
          _
        $region24: #{tpu_custom_call.1} parent=11 // pred_fallthru
          _
        // Predicated region
        $region25: #{tpu_custom_call.1} parent=11 // pred_check
          %p329 = pneg %p133
        $region26: #{tpu_custom_call.1} parent=11 // pred_check_branch
          %331 = sbr.rel (%p329) target = $region28
        $region27: #{tpu_custom_call.1} parent=11 // pred_region
          _
        $region28: #{tpu_custom_call.1} parent=11 // pred_fallthru
          _
        // Predicated region
        $region29: #{tpu_custom_call.1} parent=11 // pred_check
          %p332 = pneg %p154
        $region30: #{tpu_custom_call.1} parent=11 // pred_check_branch
          %334 = sbr.rel (%p332) target = $region32
        $region31: #{tpu_custom_call.1} parent=11 // pred_region
          %336 = vsyncadd [#allocation6], 0
          %s338 = sshll.u32 %s5, 4
          %s339 = int_to_ptr.hbm [resolvable:$true] %s338
          %s340 = sshll.u32 [#allocation7], 4
          %s341 = int_to_ptr.vmem [resolvable:$true] %s340
          %343 = dma.hbm_to_vmem [thread:$0]  %s339, 16, %s341, [#allocation6]
        $region32: #{tpu_custom_call.1} parent=11 // pred_fallthru
          _
        // Predicated region
        $region33: #{tpu_custom_call.1} parent=11 // pred_check
          %p344 = pneg %p175
        $region34: #{tpu_custom_call.1} parent=11 // pred_check_branch
          %346 = sbr.rel (%p344) target = $region36
        $region35: #{tpu_custom_call.1} parent=11 // pred_region
          %348 = vsyncadd [#allocation9], 0
          %s350 = sshll.u32 %s6, 4
          %s351 = int_to_ptr.hbm [resolvable:$true] %s350
          %s352 = sshll.u32 [#allocation8], 4
          %s353 = int_to_ptr.vmem [resolvable:$true] %s352
          %355 = dma.hbm_to_vmem [thread:$0]  %s351, 16, %s353, [#allocation9]
        $region36: #{tpu_custom_call.1} parent=11 // pred_fallthru
          _
        // Predicated region
        $region37: #{tpu_custom_call.1} parent=11 // pred_check
          %p356 = pneg %p196
        $region38: #{tpu_custom_call.1} parent=11 // pred_check_branch
          %358 = sbr.rel (%p356) target = $region40
        $region39: #{tpu_custom_call.1} parent=11 // pred_region
          _
        $region40: #{tpu_custom_call.1} parent=11 // pred_fallthru
          _
        // Predicated region
        $region41: #{tpu_custom_call.1} parent=11 // pred_check
          %p359 = pneg %p217
        $region42: #{tpu_custom_call.1} parent=11 // pred_check_branch
          %361 = sbr.rel (%p359) target = $region44
        $region43: #{tpu_custom_call.1} parent=11 // pred_region
          _
        $region44: #{tpu_custom_call.1} parent=11 // pred_fallthru
          _
        // Predicated region
        $region45: #{tpu_custom_call.1} parent=11 // pred_check
          %p362 = pneg %p238
        $region46: #{tpu_custom_call.1} parent=11 // pred_check_branch
          %364 = sbr.rel (%p362) target = $region48
        $region47: #{tpu_custom_call.1} parent=11 // pred_region
          %366 = vsyncadd [#allocation9], 0
          %s367 = sshll.u32 %s9, 4
          %s368 = int_to_ptr.hbm [resolvable:$true] %s367
          %s369 = sshll.u32 [#allocation10], 4
          %s370 = int_to_ptr.vmem [resolvable:$true] %s369
          %375 = dma.hbm_to_vmem [thread:$0]  %s368, 8192, %s370, [#allocation9], 256, 256, 16
        $region48: #{tpu_custom_call.1} parent=11 // pred_fallthru
          _
        // Predicated region
        $region49: #{tpu_custom_call.1} parent=11 // pred_check
          %p376 = pneg %p259
        $region50: #{tpu_custom_call.1} parent=11 // pred_check_branch
          %378 = sbr.rel (%p376) target = $region52
        $region51: #{tpu_custom_call.1} parent=11 // pred_region
          _
        $region52: #{tpu_custom_call.1} parent=11 // pred_fallthru
          _
      $region12: #{tpu_custom_call.1} parent=5 // pred_fallthru
        _
      %p379 = scmp.lt.s32.totalorder %s23, 2
      // Predicated region
      $region53: #{tpu_custom_call.1} parent=5 // pred_check
        %p380 = pneg %p379
      $region54: #{tpu_custom_call.1} parent=5 // pred_check_branch
        %382 = sbr.rel (%p380) target = $region56
      $region55: #{tpu_custom_call.1} parent=5 // pred_region
        // Predicated region
        $region57: #{tpu_custom_call.1} parent=55 // pred_check
          %p383 = pneg %p43
        $region58: #{tpu_custom_call.1} parent=55 // pred_check_branch
          %385 = sbr.rel (%p383) target = $region60
        $region59: #{tpu_custom_call.1} parent=55 // pred_region
          %s386 = smul.u32 4, %s23
          %p387 = scmp.lt.s32.totalorder %s386, 7
          %s388 = scalar_select %p387, %s386, 7
          %s389 = smul.addr %s388, 4
          %s390 = smul.addr %s389, 4
          %s391 = scalar_lea.vmem %s0, %s390
          %s392 = smul.u32 4, %s23
        $region60: #{tpu_custom_call.1} parent=55 // pred_fallthru
          _
      $region56: #{tpu_custom_call.1} parent=5 // pred_fallthru
        _
      %p393 = scmp.le.s32.totalorder 1, %s23
      %p394 = scmp.lt.s32.totalorder %s23, 3
      %p395 = pnand %p393, %p394
      %p396 = pneg %p395
      // Predicated region
      $region61: #{tpu_custom_call.1} parent=5 // pred_check
        _
      $region62: #{tpu_custom_call.1} parent=5 // pred_check_branch
        %398 = sbr.rel (%p395) target = $region64
      $region63: #{tpu_custom_call.1} parent=5 // pred_region
        %s399 = ssub.s32 %s23, 1
        // Predicated region
        $region65: #{tpu_custom_call.1} parent=63 // pred_check
          %p400 = pneg %p70
        $region66: #{tpu_custom_call.1} parent=63 // pred_check_branch
          %402 = sbr.rel (%p400) target = $region68
        $region67: #{tpu_custom_call.1} parent=63 // pred_region
          %404 = dma.done [#allocation3], 8192
        $region68: #{tpu_custom_call.1} parent=63 // pred_fallthru
          _
        // Predicated region
        $region69: #{tpu_custom_call.1} parent=63 // pred_check
          %p405 = pneg %p91
        $region70: #{tpu_custom_call.1} parent=63 // pred_check_branch
          %407 = sbr.rel (%p405) target = $region72
        $region71: #{tpu_custom_call.1} parent=63 // pred_region
          %409 = dma.done [#allocation6], 32
        $region72: #{tpu_custom_call.1} parent=63 // pred_fallthru
          _
        // Predicated region
        $region73: #{tpu_custom_call.1} parent=63 // pred_check
          %p410 = pneg %p154
        $region74: #{tpu_custom_call.1} parent=63 // pred_check_branch
          %412 = sbr.rel (%p410) target = $region76
        $region75: #{tpu_custom_call.1} parent=63 // pred_region
          %414 = dma.done [#allocation6], 16
        $region76: #{tpu_custom_call.1} parent=63 // pred_fallthru
          _
        // Predicated region
        $region77: #{tpu_custom_call.1} parent=63 // pred_check
          %p415 = pneg %p175
        $region78: #{tpu_custom_call.1} parent=63 // pred_check_branch
          %417 = sbr.rel (%p415) target = $region80
        $region79: #{tpu_custom_call.1} parent=63 // pred_region
          %419 = dma.done [#allocation9], 16
        $region80: #{tpu_custom_call.1} parent=63 // pred_fallthru
          _
        // Predicated region
        $region81: #{tpu_custom_call.1} parent=63 // pred_check
          %p420 = pneg %p238
        $region82: #{tpu_custom_call.1} parent=63 // pred_check_branch
          %422 = sbr.rel (%p420) target = $region84
        $region83: #{tpu_custom_call.1} parent=63 // pred_region
          %424 = dma.done [#allocation9], 8192
        $region84: #{tpu_custom_call.1} parent=63 // pred_fallthru
          _
        %s425 = smul.u32 4, %s28
        %p426 = scmp.lt.s32.totalorder %s425, 7
        %s427 = scalar_select %p426, %s425, 7
        %s428 = smul.addr %s427, 4
        %s429 = smul.addr %s428, 4
        %s430 = scalar_lea.vmem %s0, %s429
        %p431 = pneg %p49
        %p432 = pneg %p46
        %p433 = pneg %p70
        %p434 = pneg %p67
        %p435 = pneg %p91
        %p436 = pneg %p88
        %p437 = pneg %p112
        %p438 = pneg %p109
        %p439 = pneg %p133
        %p440 = pneg %p130
        %p441 = pneg %p154
        %p442 = pneg %p151
        %p443 = pneg %p175
        %p444 = pneg %p172
        %p445 = pneg %p196
        %p446 = pneg %p193
        %p447 = pneg %p217
        %p448 = pneg %p214
        %p449 = pneg %p238
        %p450 = pneg %p235
        %p451 = pneg %p259
        %p452 = pneg %p256
        %p453 = pneg %p285
        %p454 = pneg %p282
        %s455 = sand.u32 %s272, 1
        %s456 = scalar_lea.sflag [#allocation4], %s455
        %s457 = sand.u32 %s272, 1
        %s458 = smul.addr %s457, 128
        %s459 = scalar_lea.vmem [#allocation11], %s458
        %s460 = smul.u32 4, %s28
        %p461 = scmp.lt.s32.totalorder %s460, 7
        %s462 = scalar_select %p461, %s460, 7
        %s463 = smul.addr %s462, 4
        %s464 = smul.addr %s463, 4
        %s465 = scalar_lea.vmem %s0, %s464
        %s466 = smul.u32 4, %s28
        %s467 = smul.u32 4, %s28
        %v469 = vld [vmem:[%s465] sm:$0xff]
        %v470 = vld [vmem:[%s465 + $0x8] sm:$0xff]
        %v471 = vld [vmem:[%s465 + $0x10] sm:$0xff]
        %v472 = vld [vmem:[%s465 + $0x18] sm:$0xff]
        %v473 = vld [vmem:[%s465 + $0x20] sm:$0xff]
        %v474 = vld [vmem:[%s465 + $0x28] sm:$0xff]
        %v475 = vld [vmem:[%s465 + $0x30] sm:$0xff]
        %v476 = vld [vmem:[%s465 + $0x38] sm:$0xff]
        %v477 = vld [vmem:[#allocation2] sm:$0xff]
        %v478 = vld [vmem:[#allocation2 + $0x8] sm:$0xff]
        %v479 = vld [vmem:[#allocation2 + $0x10] sm:$0xff]
        %v480 = vld [vmem:[#allocation2 + $0x18] sm:$0xff]
        %v481 = vld [vmem:[#allocation2 + $0x20] sm:$0xff]
        %v482 = vld [vmem:[#allocation2 + $0x28] sm:$0xff]
        %v483 = vld [vmem:[#allocation2 + $0x30] sm:$0xff]
        %v484 = vld [vmem:[#allocation2 + $0x38] sm:$0xff]
        %v485 = vld [vmem:[#allocation2 + $0x40] sm:$0xff]
        %v486 = vld [vmem:[#allocation2 + $0x48] sm:$0xff]
        %v487 = vld [vmem:[#allocation2 + $0x50] sm:$0xff]
        %v488 = vld [vmem:[#allocation2 + $0x58] sm:$0xff]
        %v489 = vld [vmem:[#allocation2 + $0x60] sm:$0xff]
        %v490 = vld [vmem:[#allocation2 + $0x68] sm:$0xff]
        %v491 = vld [vmem:[#allocation2 + $0x70] sm:$0xff]
        %v492 = vld [vmem:[#allocation2 + $0x78] sm:$0xff]
        %v493 = vld [vmem:[#allocation2 + $0x80] sm:$0xff]
        %v494 = vld [vmem:[#allocation2 + $0x88] sm:$0xff]
        %v495 = vld [vmem:[#allocation2 + $0x90] sm:$0xff]
        %v496 = vld [vmem:[#allocation2 + $0x98] sm:$0xff]
        %v497 = vld [vmem:[#allocation2 + $0xa0] sm:$0xff]
        %v498 = vld [vmem:[#allocation2 + $0xa8] sm:$0xff]
        %v499 = vld [vmem:[#allocation2 + $0xb0] sm:$0xff]
        %v500 = vld [vmem:[#allocation2 + $0xb8] sm:$0xff]
        %v501 = vld [vmem:[#allocation2 + $0xc0] sm:$0xff]
        %v502 = vld [vmem:[#allocation2 + $0xc8] sm:$0xff]
        %v503 = vld [vmem:[#allocation2 + $0xd0] sm:$0xff]
        %v504 = vld [vmem:[#allocation2 + $0xd8] sm:$0xff]
        %v505 = vld [vmem:[#allocation2 + $0xe0] sm:$0xff]
        %v506 = vld [vmem:[#allocation2 + $0xe8] sm:$0xff]
        %v507 = vld [vmem:[#allocation2 + $0xf0] sm:$0xff]
        %v508 = vld [vmem:[#allocation2 + $0xf8] sm:$0xff]
        %v509 = vld [vmem:[#allocation2 + $0x100] sm:$0xff]
        %v510 = vld [vmem:[#allocation2 + $0x108] sm:$0xff]
        %v511 = vld [vmem:[#allocation2 + $0x110] sm:$0xff]
        %v512 = vld [vmem:[#allocation2 + $0x118] sm:$0xff]
        %v513 = vld [vmem:[#allocation2 + $0x120] sm:$0xff]
        %v514 = vld [vmem:[#allocation2 + $0x128] sm:$0xff]
        %v515 = vld [vmem:[#allocation2 + $0x130] sm:$0xff]
        %v516 = vld [vmem:[#allocation2 + $0x138] sm:$0xff]
        %v517 = vld [vmem:[#allocation2 + $0x140] sm:$0xff]
        %v518 = vld [vmem:[#allocation2 + $0x148] sm:$0xff]
        %v519 = vld [vmem:[#allocation2 + $0x150] sm:$0xff]
        %v520 = vld [vmem:[#allocation2 + $0x158] sm:$0xff]
        %v521 = vld [vmem:[#allocation2 + $0x160] sm:$0xff]
        %v522 = vld [vmem:[#allocation2 + $0x168] sm:$0xff]
        %v523 = vld [vmem:[#allocation2 + $0x170] sm:$0xff]
        %v524 = vld [vmem:[#allocation2 + $0x178] sm:$0xff]
        %v525 = vld [vmem:[#allocation2 + $0x180] sm:$0xff]
        %v526 = vld [vmem:[#allocation2 + $0x188] sm:$0xff]
        %v527 = vld [vmem:[#allocation2 + $0x190] sm:$0xff]
        %v528 = vld [vmem:[#allocation2 + $0x198] sm:$0xff]
        %v529 = vld [vmem:[#allocation2 + $0x1a0] sm:$0xff]
        %v530 = vld [vmem:[#allocation2 + $0x1a8] sm:$0xff]
        %v531 = vld [vmem:[#allocation2 + $0x1b0] sm:$0xff]
        %v532 = vld [vmem:[#allocation2 + $0x1b8] sm:$0xff]
        %v533 = vld [vmem:[#allocation2 + $0x1c0] sm:$0xff]
        %v534 = vld [vmem:[#allocation2 + $0x1c8] sm:$0xff]
        %v535 = vld [vmem:[#allocation2 + $0x1d0] sm:$0xff]
        %v536 = vld [vmem:[#allocation2 + $0x1d8] sm:$0xff]
        %v537 = vld [vmem:[#allocation2 + $0x1e0] sm:$0xff]
        %v538 = vld [vmem:[#allocation2 + $0x1e8] sm:$0xff]
        %v539 = vld [vmem:[#allocation2 + $0x1f0] sm:$0xff]
        %v540 = vld [vmem:[#allocation2 + $0x1f8] sm:$0xff]
        %v541 = vld [vmem:[#allocation5] sm:$0x3]
        %v543 = vperm.slane %v541, 0
        %v544 = vperm.slane %v541, 1
        %v555 = vunpack.c.l.b16 %v469
        %v556 = vunpack.c.h.b16 %v469
        %v557 = vunpack.c.l.b16 %v470
        %v558 = vunpack.c.h.b16 %v470
        %v559 = vunpack.c.l.b16 %v471
        %v560 = vunpack.c.h.b16 %v471
        %v561 = vunpack.c.l.b16 %v472
        %v562 = vunpack.c.h.b16 %v472
        %v563 = vunpack.c.l.b16 %v473
        %v564 = vunpack.c.h.b16 %v473
        %v565 = vunpack.c.l.b16 %v474
        %v566 = vunpack.c.h.b16 %v474
        %v567 = vunpack.c.l.b16 %v475
        %v568 = vunpack.c.h.b16 %v475
        %v569 = vunpack.c.l.b16 %v476
        %v570 = vunpack.c.h.b16 %v476
        %v571 = vpack.c.b16 %v559, %v555
        %v572 = vpack.c.b16 %v560, %v556
        %v573 = vpack.c.b16 %v561, %v557
        %v574 = vpack.c.b16 %v562, %v558
        %v575 = vpack.c.b16 %v567, %v563
        %v576 = vpack.c.b16 %v568, %v564
        %v577 = vpack.c.b16 %v569, %v565
        %v578 = vpack.c.b16 %v570, %v566
        %v651 = vunpack.c.l.b16 %v477
        %v652 = vunpack.c.h.b16 %v477
        %v653 = vunpack.c.l.b16 %v478
        %v654 = vunpack.c.h.b16 %v478
        %v655 = vunpack.c.l.b16 %v479
        %v656 = vunpack.c.h.b16 %v479
        %v657 = vunpack.c.l.b16 %v480
        %v658 = vunpack.c.h.b16 %v480
        %v659 = vunpack.c.l.b16 %v481
        %v660 = vunpack.c.h.b16 %v481
        %v661 = vunpack.c.l.b16 %v482
        %v662 = vunpack.c.h.b16 %v482
        %v663 = vunpack.c.l.b16 %v483
        %v664 = vunpack.c.h.b16 %v483
        %v665 = vunpack.c.l.b16 %v484
        %v666 = vunpack.c.h.b16 %v484
        %v667 = vunpack.c.l.b16 %v485
        %v668 = vunpack.c.h.b16 %v485
        %v669 = vunpack.c.l.b16 %v486
        %v670 = vunpack.c.h.b16 %v486
        %v671 = vunpack.c.l.b16 %v487
        %v672 = vunpack.c.h.b16 %v487
        %v673 = vunpack.c.l.b16 %v488
        %v674 = vunpack.c.h.b16 %v488
        %v675 = vunpack.c.l.b16 %v489
        %v676 = vunpack.c.h.b16 %v489
        %v677 = vunpack.c.l.b16 %v490
        %v678 = vunpack.c.h.b16 %v490
        %v679 = vunpack.c.l.b16 %v491
        %v680 = vunpack.c.h.b16 %v491
        %v681 = vunpack.c.l.b16 %v492
        %v682 = vunpack.c.h.b16 %v492
        %v683 = vunpack.c.l.b16 %v493
        %v684 = vunpack.c.h.b16 %v493
        %v685 = vunpack.c.l.b16 %v494
        %v686 = vunpack.c.h.b16 %v494
        %v687 = vunpack.c.l.b16 %v495
        %v688 = vunpack.c.h.b16 %v495
        %v689 = vunpack.c.l.b16 %v496
        %v690 = vunpack.c.h.b16 %v496
        %v691 = vunpack.c.l.b16 %v497
        %v692 = vunpack.c.h.b16 %v497
        %v693 = vunpack.c.l.b16 %v498
        %v694 = vunpack.c.h.b16 %v498
        %v695 = vunpack.c.l.b16 %v499
        %v696 = vunpack.c.h.b16 %v499
        %v697 = vunpack.c.l.b16 %v500
        %v698 = vunpack.c.h.b16 %v500
        %v699 = vunpack.c.l.b16 %v501
        %v700 = vunpack.c.h.b16 %v501
        %v701 = vunpack.c.l.b16 %v502
        %v702 = vunpack.c.h.b16 %v502
        %v703 = vunpack.c.l.b16 %v503
        %v704 = vunpack.c.h.b16 %v503
        %v705 = vunpack.c.l.b16 %v504
        %v706 = vunpack.c.h.b16 %v504
        %v707 = vunpack.c.l.b16 %v505
        %v708 = vunpack.c.h.b16 %v505
        %v709 = vunpack.c.l.b16 %v506
        %v710 = vunpack.c.h.b16 %v506
        %v711 = vunpack.c.l.b16 %v507
        %v712 = vunpack.c.h.b16 %v507
        %v713 = vunpack.c.l.b16 %v508
        %v714 = vunpack.c.h.b16 %v508
        %v715 = vunpack.c.l.b16 %v509
        %v716 = vunpack.c.h.b16 %v509
        %v717 = vunpack.c.l.b16 %v510
        %v718 = vunpack.c.h.b16 %v510
        %v719 = vunpack.c.l.b16 %v511
        %v720 = vunpack.c.h.b16 %v511
        %v721 = vunpack.c.l.b16 %v512
        %v722 = vunpack.c.h.b16 %v512
        %v723 = vunpack.c.l.b16 %v513
        %v724 = vunpack.c.h.b16 %v513
        %v725 = vunpack.c.l.b16 %v514
        %v726 = vunpack.c.h.b16 %v514
        %v727 = vunpack.c.l.b16 %v515
        %v728 = vunpack.c.h.b16 %v515
        %v729 = vunpack.c.l.b16 %v516
        %v730 = vunpack.c.h.b16 %v516
        %v731 = vunpack.c.l.b16 %v517
        %v732 = vunpack.c.h.b16 %v517
        %v733 = vunpack.c.l.b16 %v518
        %v734 = vunpack.c.h.b16 %v518
        %v735 = vunpack.c.l.b16 %v519
        %v736 = vunpack.c.h.b16 %v519
        %v737 = vunpack.c.l.b16 %v520
        %v738 = vunpack.c.h.b16 %v520
        %v739 = vunpack.c.l.b16 %v521
        %v740 = vunpack.c.h.b16 %v521
        %v741 = vunpack.c.l.b16 %v522
        %v742 = vunpack.c.h.b16 %v522
        %v743 = vunpack.c.l.b16 %v523
        %v744 = vunpack.c.h.b16 %v523
        %v745 = vunpack.c.l.b16 %v524
        %v746 = vunpack.c.h.b16 %v524
        %v747 = vunpack.c.l.b16 %v525
        %v748 = vunpack.c.h.b16 %v525
        %v749 = vunpack.c.l.b16 %v526
        %v750 = vunpack.c.h.b16 %v526
        %v751 = vunpack.c.l.b16 %v527
        %v752 = vunpack.c.h.b16 %v527
        %v753 = vunpack.c.l.b16 %v528
        %v754 = vunpack.c.h.b16 %v528
        %v755 = vunpack.c.l.b16 %v529
        %v756 = vunpack.c.h.b16 %v529
        %v757 = vunpack.c.l.b16 %v530
        %v758 = vunpack.c.h.b16 %v530
        %v759 = vunpack.c.l.b16 %v531
        %v760 = vunpack.c.h.b16 %v531
        %v761 = vunpack.c.l.b16 %v532
        %v762 = vunpack.c.h.b16 %v532
        %v763 = vunpack.c.l.b16 %v533
        %v764 = vunpack.c.h.b16 %v533
        %v765 = vunpack.c.l.b16 %v534
        %v766 = vunpack.c.h.b16 %v534
        %v767 = vunpack.c.l.b16 %v535
        %v768 = vunpack.c.h.b16 %v535
        %v769 = vunpack.c.l.b16 %v536
        %v770 = vunpack.c.h.b16 %v536
        %v771 = vunpack.c.l.b16 %v537
        %v772 = vunpack.c.h.b16 %v537
        %v773 = vunpack.c.l.b16 %v538
        %v774 = vunpack.c.h.b16 %v538
        %v775 = vunpack.c.l.b16 %v539
        %v776 = vunpack.c.h.b16 %v539
        %v777 = vunpack.c.l.b16 %v540
        %v778 = vunpack.c.h.b16 %v540
        %v779 = vpack.c.b16 %v653, %v651
        %v780 = vpack.c.b16 %v654, %v652
        %v781 = vpack.c.b16 %v657, %v655
        %v782 = vpack.c.b16 %v658, %v656
        %v783 = vpack.c.b16 %v661, %v659
        %v784 = vpack.c.b16 %v662, %v660
        %v785 = vpack.c.b16 %v665, %v663
        %v786 = vpack.c.b16 %v666, %v664
        %v787 = vpack.c.b16 %v669, %v667
        %v788 = vpack.c.b16 %v670, %v668
        %v789 = vpack.c.b16 %v673, %v671
        %v790 = vpack.c.b16 %v674, %v672
        %v791 = vpack.c.b16 %v677, %v675
        %v792 = vpack.c.b16 %v678, %v676
        %v793 = vpack.c.b16 %v681, %v679
        %v794 = vpack.c.b16 %v682, %v680
        %v795 = vpack.c.b16 %v685, %v683
        %v796 = vpack.c.b16 %v686, %v684
        %v797 = vpack.c.b16 %v689, %v687
        %v798 = vpack.c.b16 %v690, %v688
        %v799 = vpack.c.b16 %v693, %v691
        %v800 = vpack.c.b16 %v694, %v692
        %v801 = vpack.c.b16 %v697, %v695
        %v802 = vpack.c.b16 %v698, %v696
        %v803 = vpack.c.b16 %v701, %v699
        %v804 = vpack.c.b16 %v702, %v700
        %v805 = vpack.c.b16 %v705, %v703
        %v806 = vpack.c.b16 %v706, %v704
        %v807 = vpack.c.b16 %v709, %v707
        %v808 = vpack.c.b16 %v710, %v708
        %v809 = vpack.c.b16 %v713, %v711
        %v810 = vpack.c.b16 %v714, %v712
        %v811 = vpack.c.b16 %v717, %v715
        %v812 = vpack.c.b16 %v718, %v716
        %v813 = vpack.c.b16 %v721, %v719
        %v814 = vpack.c.b16 %v722, %v720
        %v815 = vpack.c.b16 %v725, %v723
        %v816 = vpack.c.b16 %v726, %v724
        %v817 = vpack.c.b16 %v729, %v727
        %v818 = vpack.c.b16 %v730, %v728
        %v819 = vpack.c.b16 %v733, %v731
        %v820 = vpack.c.b16 %v734, %v732
        %v821 = vpack.c.b16 %v737, %v735
        %v822 = vpack.c.b16 %v738, %v736
        %v823 = vpack.c.b16 %v741, %v739
        %v824 = vpack.c.b16 %v742, %v740
        %v825 = vpack.c.b16 %v745, %v743
        %v826 = vpack.c.b16 %v746, %v744
        %v827 = vpack.c.b16 %v749, %v747
        %v828 = vpack.c.b16 %v750, %v748
        %v829 = vpack.c.b16 %v753, %v751
        %v830 = vpack.c.b16 %v754, %v752
        %v831 = vpack.c.b16 %v757, %v755
        %v832 = vpack.c.b16 %v758, %v756
        %v833 = vpack.c.b16 %v761, %v759
        %v834 = vpack.c.b16 %v762, %v760
        %v835 = vpack.c.b16 %v765, %v763
        %v836 = vpack.c.b16 %v766, %v764
        %v837 = vpack.c.b16 %v769, %v767
        %v838 = vpack.c.b16 %v770, %v768
        %v839 = vpack.c.b16 %v773, %v771
        %v840 = vpack.c.b16 %v774, %v772
        %v841 = vpack.c.b16 %v777, %v775
        %v842 = vpack.c.b16 %v778, %v776
        %907 = vmatpush.bf16.msra.mxu0 %v793
        %908 = vmatpush.bf16.msra.mxu0 %v791
        %909 = vmatpush.bf16.msra.mxu0 %v789
        %910 = vmatpush.bf16.msra.mxu0 %v787
        %911 = vmatpush.bf16.msra.mxu0 %v785
        %912 = vmatpush.bf16.msra.mxu0 %v783
        %913 = vmatpush.bf16.msra.mxu0 %v781
        %914 = vmatpush.bf16.msra.mxu0 %v779
        %915 = vmatmul.bf16.gmra.mxu0 %v571
        %v916 = vpop.f32.mrf.mxu0
        %v917 = vadd.f32 %v543, %v916
        %v918 = vpop.f32.mrf.mxu0
        %v919 = vadd.f32 %v543, %v918
        %920 = vmatmul.bf16.gmra.mxu0 %v575
        %v921 = vpop.f32.mrf.mxu0
        %v922 = vadd.f32 %v543, %v921
        %v923 = vpop.f32.mrf.mxu0
        %v924 = vadd.f32 %v543, %v923
        %925 = vdwg.mxu0
        %926 = vmatpush.bf16.msra.mxu0 %v809
        %927 = vmatpush.bf16.msra.mxu0 %v807
        %928 = vmatpush.bf16.msra.mxu0 %v805
        %929 = vmatpush.bf16.msra.mxu0 %v803
        %930 = vmatpush.bf16.msra.mxu0 %v801
        %931 = vmatpush.bf16.msra.mxu0 %v799
        %932 = vmatpush.bf16.msra.mxu0 %v797
        %933 = vmatpush.bf16.msra.mxu0 %v795
        %934 = vmatmul.bf16.gmra.mxu0 %v572
        %v935 = vpop.f32.mrf.mxu0
        %v936 = vadd.f32 %v917, %v935
        %v937 = vpop.f32.mrf.mxu0
        %v938 = vadd.f32 %v919, %v937
        %939 = vmatmul.bf16.gmra.mxu0 %v576
        %v940 = vpop.f32.mrf.mxu0
        %v941 = vadd.f32 %v922, %v940
        %v942 = vpop.f32.mrf.mxu0
        %v943 = vadd.f32 %v924, %v942
        %944 = vdwg.mxu0
        %945 = vmatpush.bf16.msra.mxu0 %v825
        %946 = vmatpush.bf16.msra.mxu0 %v823
        %947 = vmatpush.bf16.msra.mxu0 %v821
        %948 = vmatpush.bf16.msra.mxu0 %v819
        %949 = vmatpush.bf16.msra.mxu0 %v817
        %950 = vmatpush.bf16.msra.mxu0 %v815
        %951 = vmatpush.bf16.msra.mxu0 %v813
        %952 = vmatpush.bf16.msra.mxu0 %v811
        %953 = vmatmul.bf16.gmra.mxu0 %v573
        %v954 = vpop.f32.mrf.mxu0
        %v955 = vadd.f32 %v936, %v954
        %v956 = vpop.f32.mrf.mxu0
        %v957 = vadd.f32 %v938, %v956
        %958 = vmatmul.bf16.gmra.mxu0 %v577
        %v959 = vpop.f32.mrf.mxu0
        %v960 = vadd.f32 %v941, %v959
        %v961 = vpop.f32.mrf.mxu0
        %v962 = vadd.f32 %v943, %v961
        %963 = vdwg.mxu0
        %964 = vmatpush.bf16.msra.mxu0 %v841
        %965 = vmatpush.bf16.msra.mxu0 %v839
        %966 = vmatpush.bf16.msra.mxu0 %v837
        %967 = vmatpush.bf16.msra.mxu0 %v835
        %968 = vmatpush.bf16.msra.mxu0 %v833
        %969 = vmatpush.bf16.msra.mxu0 %v831
        %970 = vmatpush.bf16.msra.mxu0 %v829
        %971 = vmatpush.bf16.msra.mxu0 %v827
        %972 = vmatmul.bf16.gmra.mxu0 %v574
        %v973 = vpop.f32.mrf.mxu0
        %v974 = vadd.f32 %v955, %v973
        %v975 = vpop.f32.mrf.mxu0
        %v976 = vadd.f32 %v957, %v975
        %977 = vmatmul.bf16.gmra.mxu0 %v578
        %v978 = vpop.f32.mrf.mxu0
        %v979 = vadd.f32 %v960, %v978
        %v980 = vpop.f32.mrf.mxu0
        %v981 = vadd.f32 %v962, %v980
        %982 = vdwg.mxu0
        %983 = vmatpush.bf16.msra.mxu0 %v794
        %984 = vmatpush.bf16.msra.mxu0 %v792
        %985 = vmatpush.bf16.msra.mxu0 %v790
        %986 = vmatpush.bf16.msra.mxu0 %v788
        %987 = vmatpush.bf16.msra.mxu0 %v786
        %988 = vmatpush.bf16.msra.mxu0 %v784
        %989 = vmatpush.bf16.msra.mxu0 %v782
        %990 = vmatpush.bf16.msra.mxu0 %v780
        %991 = vmatmul.bf16.gmra.mxu0 %v571
        %v992 = vpop.f32.mrf.mxu0
        %v993 = vadd.f32 %v544, %v992
        %v994 = vpop.f32.mrf.mxu0
        %v995 = vadd.f32 %v544, %v994
        %996 = vmatmul.bf16.gmra.mxu0 %v575
        %v997 = vpop.f32.mrf.mxu0
        %v998 = vadd.f32 %v544, %v997
        %v999 = vpop.f32.mrf.mxu0
        %v1000 = vadd.f32 %v544, %v999
        %1001 = vdwg.mxu0
        %1002 = vmatpush.bf16.msra.mxu0 %v810
        %1003 = vmatpush.bf16.msra.mxu0 %v808
        %1004 = vmatpush.bf16.msra.mxu0 %v806
        %1005 = vmatpush.bf16.msra.mxu0 %v804
        %1006 = vmatpush.bf16.msra.mxu0 %v802
        %1007 = vmatpush.bf16.msra.mxu0 %v800
        %1008 = vmatpush.bf16.msra.mxu0 %v798
        %1009 = vmatpush.bf16.msra.mxu0 %v796
        %1010 = vmatmul.bf16.gmra.mxu0 %v572
        %v1011 = vpop.f32.mrf.mxu0
        %v1012 = vadd.f32 %v993, %v1011
        %v1013 = vpop.f32.mrf.mxu0
        %v1014 = vadd.f32 %v995, %v1013
        %1015 = vmatmul.bf16.gmra.mxu0 %v576
        %v1016 = vpop.f32.mrf.mxu0
        %v1017 = vadd.f32 %v998, %v1016
        %v1018 = vpop.f32.mrf.mxu0
        %v1019 = vadd.f32 %v1000, %v1018
        %1020 = vdwg.mxu0
        %1021 = vmatpush.bf16.msra.mxu0 %v826
        %1022 = vmatpush.bf16.msra.mxu0 %v824
        %1023 = vmatpush.bf16.msra.mxu0 %v822
        %1024 = vmatpush.bf16.msra.mxu0 %v820
        %1025 = vmatpush.bf16.msra.mxu0 %v818
        %1026 = vmatpush.bf16.msra.mxu0 %v816
        %1027 = vmatpush.bf16.msra.mxu0 %v814
        %1028 = vmatpush.bf16.msra.mxu0 %v812
        %1029 = vmatmul.bf16.gmra.mxu0 %v573
        %v1030 = vpop.f32.mrf.mxu0
        %v1031 = vadd.f32 %v1012, %v1030
        %v1032 = vpop.f32.mrf.mxu0
        %v1033 = vadd.f32 %v1014, %v1032
        %1034 = vmatmul.bf16.gmra.mxu0 %v577
        %v1035 = vpop.f32.mrf.mxu0
        %v1036 = vadd.f32 %v1017, %v1035
        %v1037 = vpop.f32.mrf.mxu0
        %v1038 = vadd.f32 %v1019, %v1037
        %1039 = vdwg.mxu0
        %1040 = vmatpush.bf16.msra.mxu0 %v842
        %1041 = vmatpush.bf16.msra.mxu0 %v840
        %1042 = vmatpush.bf16.msra.mxu0 %v838
        %1043 = vmatpush.bf16.msra.mxu0 %v836
        %1044 = vmatpush.bf16.msra.mxu0 %v834
        %1045 = vmatpush.bf16.msra.mxu0 %v832
        %1046 = vmatpush.bf16.msra.mxu0 %v830
        %1047 = vmatpush.bf16.msra.mxu0 %v828
        %1048 = vmatmul.bf16.gmra.mxu0 %v574
        %v1049 = vpop.f32.mrf.mxu0
        %v1050 = vadd.f32 %v1031, %v1049
        %v1051 = vpop.f32.mrf.mxu0
        %v1052 = vadd.f32 %v1033, %v1051
        %1053 = vmatmul.bf16.gmra.mxu0 %v578
        %v1054 = vpop.f32.mrf.mxu0
        %v1055 = vadd.f32 %v1036, %v1054
        %v1056 = vpop.f32.mrf.mxu0
        %v1057 = vadd.f32 %v1038, %v1056
        %1058 = vdwg.mxu0
        %v1059 = vmax.f32 %v974, 0.0
        %v1060 = vmax.f32 %v1050, 0.0
        %v1061 = vmax.f32 %v976, 0.0
        %v1062 = vmax.f32 %v1052, 0.0
        %v1063 = vmax.f32 %v979, 0.0
        %v1064 = vmax.f32 %v1055, 0.0
        %v1065 = vmax.f32 %v981, 0.0
        %v1066 = vmax.f32 %v1057, 0.0
        %v1067 = vpack.c.bf16 %v1061, %v1059
        %v1068 = vpack.c.bf16 %v1062, %v1060
        %v1069 = vpack.c.bf16 %v1065, %v1063
        %v1070 = vpack.c.bf16 %v1066, %v1064
        %v1071 = vld [vmem:[%s3] sm:$0xf]
        %v1072 = vld [vmem:[%s3 + $0x4] sm:$0xf]
        %v1073 = vld [vmem:[%s3 + $0x8] sm:$0xf]
        %v1074 = vld [vmem:[%s3 + $0xc] sm:$0xf]
        %v1075 = vld [vmem:[%s3 + $0x10] sm:$0xf]
        %v1076 = vld [vmem:[%s3 + $0x14] sm:$0xf]
        %v1077 = vld [vmem:[%s3 + $0x18] sm:$0xf]
        %v1078 = vld [vmem:[%s3 + $0x1c] sm:$0xf]
        %v1079 = vld [vmem:[%s3 + $0x20] sm:$0xf]
        %v1080 = vld [vmem:[%s3 + $0x24] sm:$0xf]
        %v1081 = vld [vmem:[%s3 + $0x28] sm:$0xf]
        %v1082 = vld [vmem:[%s3 + $0x2c] sm:$0xf]
        %v1083 = vld [vmem:[%s3 + $0x30] sm:$0xf]
        %v1084 = vld [vmem:[%s3 + $0x34] sm:$0xf]
        %v1085 = vld [vmem:[%s3 + $0x38] sm:$0xf]
        %v1086 = vld [vmem:[%s3 + $0x3c] sm:$0xf]
        %v1087 = vld [vmem:[%s3 + $0x40] sm:$0xf]
        %v1088 = vld [vmem:[%s3 + $0x44] sm:$0xf]
        %v1089 = vld [vmem:[%s3 + $0x48] sm:$0xf]
        %v1090 = vld [vmem:[%s3 + $0x4c] sm:$0xf]
        %v1091 = vld [vmem:[%s3 + $0x50] sm:$0xf]
        %v1092 = vld [vmem:[%s3 + $0x54] sm:$0xf]
        %v1093 = vld [vmem:[%s3 + $0x58] sm:$0xf]
        %v1094 = vld [vmem:[%s3 + $0x5c] sm:$0xf]
        %v1095 = vld [vmem:[%s3 + $0x60] sm:$0xf]
        %v1096 = vld [vmem:[%s3 + $0x64] sm:$0xf]
        %v1097 = vld [vmem:[%s3 + $0x68] sm:$0xf]
        %v1098 = vld [vmem:[%s3 + $0x6c] sm:$0xf]
        %v1099 = vld [vmem:[%s3 + $0x70] sm:$0xf]
        %v1100 = vld [vmem:[%s3 + $0x74] sm:$0xf]
        %v1101 = vld [vmem:[%s3 + $0x78] sm:$0xf]
        %v1102 = vld [vmem:[%s3 + $0x7c] sm:$0xf]
        %v1103 = vld [vmem:[%s4] sm:$0x1]
        %v1105 = vperm.slane %v1103, 0
        %v1139 = vunpack.c.l.b16 %v1071
        %v1140 = vunpack.c.l.b16 %v1072
        %v1141 = vunpack.c.l.b16 %v1073
        %v1142 = vunpack.c.l.b16 %v1074
        %v1143 = vunpack.c.l.b16 %v1075
        %v1144 = vunpack.c.l.b16 %v1076
        %v1145 = vunpack.c.l.b16 %v1077
        %v1146 = vunpack.c.l.b16 %v1078
        %v1147 = vunpack.c.l.b16 %v1079
        %v1148 = vunpack.c.l.b16 %v1080
        %v1149 = vunpack.c.l.b16 %v1081
        %v1150 = vunpack.c.l.b16 %v1082
        %v1151 = vunpack.c.l.b16 %v1083
        %v1152 = vunpack.c.l.b16 %v1084
        %v1153 = vunpack.c.l.b16 %v1085
        %v1154 = vunpack.c.l.b16 %v1086
        %v1155 = vunpack.c.l.b16 %v1087
        %v1156 = vunpack.c.l.b16 %v1088
        %v1157 = vunpack.c.l.b16 %v1089
        %v1158 = vunpack.c.l.b16 %v1090
        %v1159 = vunpack.c.l.b16 %v1091
        %v1160 = vunpack.c.l.b16 %v1092
        %v1161 = vunpack.c.l.b16 %v1093
        %v1162 = vunpack.c.l.b16 %v1094
        %v1163 = vunpack.c.l.b16 %v1095
        %v1164 = vunpack.c.l.b16 %v1096
        %v1165 = vunpack.c.l.b16 %v1097
        %v1166 = vunpack.c.l.b16 %v1098
        %v1167 = vunpack.c.l.b16 %v1099
        %v1168 = vunpack.c.l.b16 %v1100
        %v1169 = vunpack.c.l.b16 %v1101
        %v1170 = vunpack.c.l.b16 %v1102
        %v1171 = vpack.c.b16 %v1140, %v1139
        %v1172 = vpack.c.b16 %v1142, %v1141
        %v1173 = vpack.c.b16 %v1144, %v1143
        %v1174 = vpack.c.b16 %v1146, %v1145
        %v1175 = vpack.c.b16 %v1148, %v1147
        %v1176 = vpack.c.b16 %v1150, %v1149
        %v1177 = vpack.c.b16 %v1152, %v1151
        %v1178 = vpack.c.b16 %v1154, %v1153
        %v1179 = vpack.c.b16 %v1156, %v1155
        %v1180 = vpack.c.b16 %v1158, %v1157
        %v1181 = vpack.c.b16 %v1160, %v1159
        %v1182 = vpack.c.b16 %v1162, %v1161
        %v1183 = vpack.c.b16 %v1164, %v1163
        %v1184 = vpack.c.b16 %v1166, %v1165
        %v1185 = vpack.c.b16 %v1168, %v1167
        %v1186 = vpack.c.b16 %v1170, %v1169
        %1203 = vmatpush.bf16.msra.mxu0 %v1178
        %1204 = vmatpush.bf16.msra.mxu0 %v1177
        %1205 = vmatpush.bf16.msra.mxu0 %v1176
        %1206 = vmatpush.bf16.msra.mxu0 %v1175
        %1207 = vmatpush.bf16.msra.mxu0 %v1174
        %1208 = vmatpush.bf16.msra.mxu0 %v1173
        %1209 = vmatpush.bf16.msra.mxu0 %v1172
        %1210 = vmatpush.bf16.msra.mxu0 %v1171
        %1211 = vmatmul.bf16.gmra.mxu0 %v1067
        %v1212 = vpop.f32.mrf.mxu0
        %v1213 = vadd.f32 %v1105, %v1212
        %v1214 = vpop.f32.mrf.mxu0
        %v1215 = vadd.f32 %v1105, %v1214
        %1216 = vmatmul.bf16.gmra.mxu0 %v1069
        %v1217 = vpop.f32.mrf.mxu0
        %v1218 = vadd.f32 %v1105, %v1217
        %v1219 = vpop.f32.mrf.mxu0
        %v1220 = vadd.f32 %v1105, %v1219
        %1221 = vdwg.mxu0
        %1222 = vmatpush.bf16.msra.mxu0 %v1186
        %1223 = vmatpush.bf16.msra.mxu0 %v1185
        %1224 = vmatpush.bf16.msra.mxu0 %v1184
        %1225 = vmatpush.bf16.msra.mxu0 %v1183
        %1226 = vmatpush.bf16.msra.mxu0 %v1182
        %1227 = vmatpush.bf16.msra.mxu0 %v1181
        %1228 = vmatpush.bf16.msra.mxu0 %v1180
        %1229 = vmatpush.bf16.msra.mxu0 %v1179
        %1230 = vmatmul.bf16.gmra.mxu0 %v1068
        %v1231 = vpop.f32.mrf.mxu0
        %v1232 = vadd.f32 %v1213, %v1231
        %v1233 = vpop.f32.mrf.mxu0
        %v1234 = vadd.f32 %v1215, %v1233
        %1235 = vmatmul.bf16.gmra.mxu0 %v1070
        %v1236 = vpop.f32.mrf.mxu0
        %v1237 = vadd.f32 %v1218, %v1236
        %v1238 = vpop.f32.mrf.mxu0
        %v1239 = vadd.f32 %v1220, %v1238
        %1240 = vdwg.mxu0
        %vm1241 = vcmask 326656
        %v1242 = vsel %vm1241, %v1232, 0.0
        %1243 = vadd.xlane.f32.xlu0 %v1242
        %v1244 = vpop.xlane.xlu0 %1243
        %v1245 = vsel %vm1241, %v1234, 0.0
        %1246 = vadd.xlane.f32.xlu0 %v1245
        %v1247 = vpop.xlane.xlu0 %1246
        %v1248 = vsel %vm1241, %v1237, 0.0
        %1249 = vadd.xlane.f32.xlu0 %v1248
        %v1250 = vpop.xlane.xlu0 %1249
        %v1251 = vsel %vm1241, %v1239, 0.0
        %1252 = vadd.xlane.f32.xlu0 %v1251
        %v1253 = vpop.xlane.xlu0 %1252
        %v1254 = vrcp.pop 40.0
        %v1255 = vmul.f32 40.0, %v1254
        %v1256 = vsub.f32 1.0, %v1255
        %v1257 = vmul.f32 %v1254, %v1256
        %v1258 = vadd.f32 %v1254, %v1257
        %vm1259 = vweird.f32 %v1254
        %v1260 = vsel %vm1259, %v1254, %v1258
        %v1261 = vmul.f32 %v1244, %v1260
        %v1262 = vmul.f32 %v1247, %v1260
        %v1263 = vmul.f32 %v1250, %v1260
        %v1264 = vmul.f32 %v1253, %v1260
        %v1265 = vsub.f32 %v1232, %v1261
        %v1266 = vsub.f32 %v1234, %v1262
        %v1267 = vsub.f32 %v1237, %v1263
        %v1268 = vsub.f32 %v1239, %v1264
        %v1269 = vmul.f32 %v1265, %v1265
        %v1270 = vmul.f32 %v1266, %v1266
        %v1271 = vmul.f32 %v1267, %v1267
        %v1272 = vmul.f32 %v1268, %v1268
        %v1273 = vsel %vm1241, %v1269, 0.0
        %1274 = vadd.xlane.f32.xlu0 %v1273
        %v1275 = vpop.xlane.xlu0 %1274
        %v1276 = vsel %vm1241, %v1270, 0.0
        %1277 = vadd.xlane.f32.xlu0 %v1276
        %v1278 = vpop.xlane.xlu0 %1277
        %v1279 = vsel %vm1241, %v1271, 0.0
        %1280 = vadd.xlane.f32.xlu0 %v1279
        %v1281 = vpop.xlane.xlu0 %1280
        %v1282 = vsel %vm1241, %v1272, 0.0
        %1283 = vadd.xlane.f32.xlu0 %v1282
        %v1284 = vpop.xlane.xlu0 %1283
        %v1285 = vmul.f32 %v1275, %v1260
        %v1286 = vmul.f32 %v1278, %v1260
        %v1287 = vmul.f32 %v1281, %v1260
        %v1288 = vmul.f32 %v1284, %v1260
        %v1289 = vadd.f32 %v1285, 1e-05
        %v1290 = vadd.f32 %v1286, 1e-05
        %v1291 = vadd.f32 %v1287, 1e-05
        %v1292 = vadd.f32 %v1288, 1e-05
        %v1293 = vrsqrt.pop %v1289
        %v1294 = vmul.f32 %v1293, %v1289
        %v1295 = vmul.f32 %v1294, %v1293
        %v1296 = vmul.f32 0.5, %v1295
        %v1297 = vsub.f32 1.5, %v1296
        %v1298 = vmul.f32 %v1293, %v1297
        %vm1299 = vweird.f32 %v1289
        %vm1300 = vweird.f32 %v1293
        %vm1301 = vmor %vm1299, %vm1300
        %v1302 = vsel %vm1301, %v1293, %v1298
        %v1303 = vrsqrt.pop %v1290
        %v1304 = vmul.f32 %v1303, %v1290
        %v1305 = vmul.f32 %v1304, %v1303
        %v1306 = vmul.f32 0.5, %v1305
        %v1307 = vsub.f32 1.5, %v1306
        %v1308 = vmul.f32 %v1303, %v1307
        %vm1309 = vweird.f32 %v1290
        %vm1310 = vweird.f32 %v1303
        %vm1311 = vmor %vm1309, %vm1310
        %v1312 = vsel %vm1311, %v1303, %v1308
        %v1313 = vrsqrt.pop %v1291
        %v1314 = vmul.f32 %v1313, %v1291
        %v1315 = vmul.f32 %v1314, %v1313
        %v1316 = vmul.f32 0.5, %v1315
        %v1317 = vsub.f32 1.5, %v1316
        %v1318 = vmul.f32 %v1313, %v1317
        %vm1319 = vweird.f32 %v1291
        %vm1320 = vweird.f32 %v1313
        %vm1321 = vmor %vm1319, %vm1320
        %v1322 = vsel %vm1321, %v1313, %v1318
        %v1323 = vrsqrt.pop %v1292
        %v1324 = vmul.f32 %v1323, %v1292
        %v1325 = vmul.f32 %v1324, %v1323
        %v1326 = vmul.f32 0.5, %v1325
        %v1327 = vsub.f32 1.5, %v1326
        %v1328 = vmul.f32 %v1323, %v1327
        %vm1329 = vweird.f32 %v1292
        %vm1330 = vweird.f32 %v1323
        %vm1331 = vmor %vm1329, %vm1330
        %v1332 = vsel %vm1331, %v1323, %v1328
        %v1333 = vmul.f32 %v1265, %v1302
        %v1334 = vmul.f32 %v1266, %v1312
        %v1335 = vmul.f32 %v1267, %v1322
        %v1336 = vmul.f32 %v1268, %v1332
        %v1337 = vld [vmem:[#allocation7] sm:$0x1]
        %v1339 = vperm.slane %v1337, 0
        %v1341 = vmul.f32 %v1333, %v1339
        %v1342 = vmul.f32 %v1334, %v1339
        %v1343 = vmul.f32 %v1335, %v1339
        %v1344 = vmul.f32 %v1336, %v1339
        %v1345 = vld [vmem:[#allocation8] sm:$0x1]
        %v1347 = vperm.slane %v1345, 0
        %v1349 = vadd.f32 %v1341, %v1347
        %v1350 = vadd.f32 %v1342, %v1347
        %v1351 = vadd.f32 %v1343, %v1347
        %v1352 = vadd.f32 %v1344, %v1347
        %v1353 = vpack.c.bf16 %v1350, %v1349
        %v1354 = vpack.c.bf16 %v1352, %v1351
        %v1355 = vld [vmem:[%s7] sm:$0xff]
        %v1356 = vld [vmem:[%s7 + $0x8] sm:$0xff]
        %v1357 = vld [vmem:[%s7 + $0x10] sm:$0xff]
        %v1358 = vld [vmem:[%s7 + $0x18] sm:$0xff]
        %v1359 = vld [vmem:[%s7 + $0x20] sm:$0xff]
        %v1360 = vld [vmem:[%s8] sm:$0x3]
        %v1362 = vperm.slane %v1360, 0
        %v1363 = vperm.slane %v1360, 1
        %v1371 = vunpack.c.l.b16 %v1355
        %v1372 = vunpack.c.h.b16 %v1355
        %v1373 = vunpack.c.l.b16 %v1356
        %v1374 = vunpack.c.h.b16 %v1356
        %v1375 = vunpack.c.l.b16 %v1357
        %v1376 = vunpack.c.h.b16 %v1357
        %v1377 = vunpack.c.l.b16 %v1358
        %v1378 = vunpack.c.h.b16 %v1358
        %v1379 = vunpack.c.l.b16 %v1359
        %v1380 = vunpack.c.h.b16 %v1359
        %v1381 = vpack.c.b16 %v1373, %v1371
        %v1382 = vpack.c.b16 %v1374, %v1372
        %v1383 = vpack.c.b16 %v1377, %v1375
        %v1384 = vpack.c.b16 %v1378, %v1376
        %v1385 = vpack.c.b16 %v1379, %v1379
        %v1386 = vpack.c.b16 %v1380, %v1380
        %v1392 = vsel %vm1241, %v1353, 0
        %v1395 = vsel %vm1241, %v1354, 0
        %vm1397 = vcmask 1043456
        %v1399 = vsel %vm1397, %v1385, 0
        %v1402 = vsel %vm1397, %v1386, 0
        %1404 = vmatpush.bf16.msra.mxu0 0
        %1405 = vmatpush.bf16.msra.mxu0 0
        %1406 = vmatpush.bf16.msra.mxu0 0
        %1407 = vmatpush.bf16.msra.mxu0 0
        %1408 = vmatpush.bf16.msra.mxu0 0
        %1409 = vmatpush.bf16.msra.mxu0 %v1399
        %1410 = vmatpush.bf16.msra.mxu0 %v1383
        %1411 = vmatpush.bf16.msra.mxu0 %v1381
        %1412 = vmatmul.bf16.gmra.mxu0 %v1392
        %v1413 = vpop.f32.mrf.mxu0
        %v1414 = vadd.f32 %v1362, %v1413
        %v1415 = vpop.f32.mrf.mxu0
        %v1416 = vadd.f32 %v1362, %v1415
        %1417 = vmatmul.bf16.gmra.mxu0 %v1395
        %v1418 = vpop.f32.mrf.mxu0
        %v1419 = vadd.f32 %v1362, %v1418
        %v1420 = vpop.f32.mrf.mxu0
        %v1421 = vadd.f32 %v1362, %v1420
        %1422 = vdwg.mxu0
        %1423 = vmatpush.bf16.msra.mxu0 0
        %1424 = vmatpush.bf16.msra.mxu0 0
        %1425 = vmatpush.bf16.msra.mxu0 0
        %1426 = vmatpush.bf16.msra.mxu0 0
        %1427 = vmatpush.bf16.msra.mxu0 0
        %1428 = vmatpush.bf16.msra.mxu0 %v1402
        %1429 = vmatpush.bf16.msra.mxu0 %v1384
        %1430 = vmatpush.bf16.msra.mxu0 %v1382
        %1431 = vmatmul.bf16.gmra.mxu0 %v1392
        %v1432 = vpop.f32.mrf.mxu0
        %v1433 = vadd.f32 %v1363, %v1432
        %v1434 = vpop.f32.mrf.mxu0
        %v1435 = vadd.f32 %v1363, %v1434
        %1436 = vmatmul.bf16.gmra.mxu0 %v1395
        %v1437 = vpop.f32.mrf.mxu0
        %v1438 = vadd.f32 %v1363, %v1437
        %v1439 = vpop.f32.mrf.mxu0
        %v1440 = vadd.f32 %v1363, %v1439
        %1441 = vdwg.mxu0
        %v1442 = vmax.f32 %v1414, 0.0
        %v1443 = vmax.f32 %v1433, 0.0
        %v1444 = vmax.f32 %v1416, 0.0
        %v1445 = vmax.f32 %v1435, 0.0
        %v1446 = vmax.f32 %v1419, 0.0
        %v1447 = vmax.f32 %v1438, 0.0
        %v1448 = vmax.f32 %v1421, 0.0
        %v1449 = vmax.f32 %v1440, 0.0
        %v1450 = vpack.c.bf16 %v1444, %v1442
        %v1451 = vpack.c.bf16 %v1445, %v1443
        %v1452 = vpack.c.bf16 %v1448, %v1446
        %v1453 = vpack.c.bf16 %v1449, %v1447
        %v1454 = vld [vmem:[#allocation10] sm:$0xff]
        %v1455 = vld [vmem:[#allocation10 + $0x8] sm:$0xff]
        %v1456 = vld [vmem:[#allocation10 + $0x10] sm:$0xff]
        %v1457 = vld [vmem:[#allocation10 + $0x18] sm:$0xff]
        %v1458 = vld [vmem:[#allocation10 + $0x20] sm:$0xff]
        %v1459 = vld [vmem:[#allocation10 + $0x28] sm:$0xff]
        %v1460 = vld [vmem:[#allocation10 + $0x30] sm:$0xff]
        %v1461 = vld [vmem:[#allocation10 + $0x38] sm:$0xff]
        %v1462 = vld [vmem:[#allocation10 + $0x40] sm:$0xff]
        %v1463 = vld [vmem:[#allocation10 + $0x48] sm:$0xff]
        %v1464 = vld [vmem:[#allocation10 + $0x50] sm:$0xff]
        %v1465 = vld [vmem:[#allocation10 + $0x58] sm:$0xff]
        %v1466 = vld [vmem:[#allocation10 + $0x60] sm:$0xff]
        %v1467 = vld [vmem:[#allocation10 + $0x68] sm:$0xff]
        %v1468 = vld [vmem:[#allocation10 + $0x70] sm:$0xff]
        %v1469 = vld [vmem:[#allocation10 + $0x78] sm:$0xff]
        %v1470 = vld [vmem:[#allocation10 + $0x80] sm:$0xff]
        %v1471 = vld [vmem:[#allocation10 + $0x88] sm:$0xff]
        %v1472 = vld [vmem:[#allocation10 + $0x90] sm:$0xff]
        %v1473 = vld [vmem:[#allocation10 + $0x98] sm:$0xff]
        %v1474 = vld [vmem:[#allocation10 + $0xa0] sm:$0xff]
        %v1475 = vld [vmem:[#allocation10 + $0xa8] sm:$0xff]
        %v1476 = vld [vmem:[#allocation10 + $0xb0] sm:$0xff]
        %v1477 = vld [vmem:[#allocation10 + $0xb8] sm:$0xff]
        %v1478 = vld [vmem:[#allocation10 + $0xc0] sm:$0xff]
        %v1479 = vld [vmem:[#allocation10 + $0xc8] sm:$0xff]
        %v1480 = vld [vmem:[#allocation10 + $0xd0] sm:$0xff]
        %v1481 = vld [vmem:[#allocation10 + $0xd8] sm:$0xff]
        %v1482 = vld [vmem:[#allocation10 + $0xe0] sm:$0xff]
        %v1483 = vld [vmem:[#allocation10 + $0xe8] sm:$0xff]
        %v1484 = vld [vmem:[#allocation10 + $0xf0] sm:$0xff]
        %v1485 = vld [vmem:[#allocation10 + $0xf8] sm:$0xff]
        %v1486 = vld [vmem:[#allocation10 + $0x100] sm:$0xff]
        %v1487 = vld [vmem:[#allocation10 + $0x108] sm:$0xff]
        %v1488 = vld [vmem:[#allocation10 + $0x110] sm:$0xff]
        %v1489 = vld [vmem:[#allocation10 + $0x118] sm:$0xff]
        %v1490 = vld [vmem:[#allocation10 + $0x120] sm:$0xff]
        %v1491 = vld [vmem:[#allocation10 + $0x128] sm:$0xff]
        %v1492 = vld [vmem:[#allocation10 + $0x130] sm:$0xff]
        %v1493 = vld [vmem:[#allocation10 + $0x138] sm:$0xff]
        %v1494 = vld [vmem:[#allocation10 + $0x140] sm:$0xff]
        %v1495 = vld [vmem:[#allocation10 + $0x148] sm:$0xff]
        %v1496 = vld [vmem:[#allocation10 + $0x150] sm:$0xff]
        %v1497 = vld [vmem:[#allocation10 + $0x158] sm:$0xff]
        %v1498 = vld [vmem:[#allocation10 + $0x160] sm:$0xff]
        %v1499 = vld [vmem:[#allocation10 + $0x168] sm:$0xff]
        %v1500 = vld [vmem:[#allocation10 + $0x170] sm:$0xff]
        %v1501 = vld [vmem:[#allocation10 + $0x178] sm:$0xff]
        %v1502 = vld [vmem:[#allocation10 + $0x180] sm:$0xff]
        %v1503 = vld [vmem:[#allocation10 + $0x188] sm:$0xff]
        %v1504 = vld [vmem:[#allocation10 + $0x190] sm:$0xff]
        %v1505 = vld [vmem:[#allocation10 + $0x198] sm:$0xff]
        %v1506 = vld [vmem:[#allocation10 + $0x1a0] sm:$0xff]
        %v1507 = vld [vmem:[#allocation10 + $0x1a8] sm:$0xff]
        %v1508 = vld [vmem:[#allocation10 + $0x1b0] sm:$0xff]
        %v1509 = vld [vmem:[#allocation10 + $0x1b8] sm:$0xff]
        %v1510 = vld [vmem:[#allocation10 + $0x1c0] sm:$0xff]
        %v1511 = vld [vmem:[#allocation10 + $0x1c8] sm:$0xff]
        %v1512 = vld [vmem:[#allocation10 + $0x1d0] sm:$0xff]
        %v1513 = vld [vmem:[#allocation10 + $0x1d8] sm:$0xff]
        %v1514 = vld [vmem:[#allocation10 + $0x1e0] sm:$0xff]
        %v1515 = vld [vmem:[#allocation10 + $0x1e8] sm:$0xff]
        %v1516 = vld [vmem:[#allocation10 + $0x1f0] sm:$0xff]
        %v1517 = vld [vmem:[#allocation10 + $0x1f8] sm:$0xff]
        %v1518 = vld [vmem:[%s10] sm:$0xf]
        %v1520 = vperm.slane %v1518, 0
        %v1521 = vperm.slane %v1518, 1
        %v1522 = vperm.slane %v1518, 2
        %v1523 = vperm.slane %v1518, 3
        %v1592 = vunpack.c.l.b16 %v1454
        %v1593 = vunpack.c.h.b16 %v1454
        %v1594 = vunpack.c.l.b16 %v1455
        %v1595 = vunpack.c.h.b16 %v1455
        %v1596 = vunpack.c.l.b16 %v1456
        %v1597 = vunpack.c.h.b16 %v1456
        %v1598 = vunpack.c.l.b16 %v1457
        %v1599 = vunpack.c.h.b16 %v1457
        %v1600 = vunpack.c.l.b16 %v1458
        %v1601 = vunpack.c.h.b16 %v1458
        %v1602 = vunpack.c.l.b16 %v1459
        %v1603 = vunpack.c.h.b16 %v1459
        %v1604 = vunpack.c.l.b16 %v1460
        %v1605 = vunpack.c.h.b16 %v1460
        %v1606 = vunpack.c.l.b16 %v1461
        %v1607 = vunpack.c.h.b16 %v1461
        %v1608 = vunpack.c.l.b16 %v1462
        %v1609 = vunpack.c.h.b16 %v1462
        %v1610 = vunpack.c.l.b16 %v1463
        %v1611 = vunpack.c.h.b16 %v1463
        %v1612 = vunpack.c.l.b16 %v1464
        %v1613 = vunpack.c.h.b16 %v1464
        %v1614 = vunpack.c.l.b16 %v1465
        %v1615 = vunpack.c.h.b16 %v1465
        %v1616 = vunpack.c.l.b16 %v1466
        %v1617 = vunpack.c.h.b16 %v1466
        %v1618 = vunpack.c.l.b16 %v1467
        %v1619 = vunpack.c.h.b16 %v1467
        %v1620 = vunpack.c.l.b16 %v1468
        %v1621 = vunpack.c.h.b16 %v1468
        %v1622 = vunpack.c.l.b16 %v1469
        %v1623 = vunpack.c.h.b16 %v1469
        %v1624 = vunpack.c.l.b16 %v1470
        %v1625 = vunpack.c.h.b16 %v1470
        %v1626 = vunpack.c.l.b16 %v1471
        %v1627 = vunpack.c.h.b16 %v1471
        %v1628 = vunpack.c.l.b16 %v1472
        %v1629 = vunpack.c.h.b16 %v1472
        %v1630 = vunpack.c.l.b16 %v1473
        %v1631 = vunpack.c.h.b16 %v1473
        %v1632 = vunpack.c.l.b16 %v1474
        %v1633 = vunpack.c.h.b16 %v1474
        %v1634 = vunpack.c.l.b16 %v1475
        %v1635 = vunpack.c.h.b16 %v1475
        %v1636 = vunpack.c.l.b16 %v1476
        %v1637 = vunpack.c.h.b16 %v1476
        %v1638 = vunpack.c.l.b16 %v1477
        %v1639 = vunpack.c.h.b16 %v1477
        %v1640 = vunpack.c.l.b16 %v1478
        %v1641 = vunpack.c.h.b16 %v1478
        %v1642 = vunpack.c.l.b16 %v1479
        %v1643 = vunpack.c.h.b16 %v1479
        %v1644 = vunpack.c.l.b16 %v1480
        %v1645 = vunpack.c.h.b16 %v1480
        %v1646 = vunpack.c.l.b16 %v1481
        %v1647 = vunpack.c.h.b16 %v1481
        %v1648 = vunpack.c.l.b16 %v1482
        %v1649 = vunpack.c.h.b16 %v1482
        %v1650 = vunpack.c.l.b16 %v1483
        %v1651 = vunpack.c.h.b16 %v1483
        %v1652 = vunpack.c.l.b16 %v1484
        %v1653 = vunpack.c.h.b16 %v1484
        %v1654 = vunpack.c.l.b16 %v1485
        %v1655 = vunpack.c.h.b16 %v1485
        %v1656 = vunpack.c.l.b16 %v1486
        %v1657 = vunpack.c.h.b16 %v1486
        %v1658 = vunpack.c.l.b16 %v1487
        %v1659 = vunpack.c.h.b16 %v1487
        %v1660 = vunpack.c.l.b16 %v1488
        %v1661 = vunpack.c.h.b16 %v1488
        %v1662 = vunpack.c.l.b16 %v1489
        %v1663 = vunpack.c.h.b16 %v1489
        %v1664 = vunpack.c.l.b16 %v1490
        %v1665 = vunpack.c.h.b16 %v1490
        %v1666 = vunpack.c.l.b16 %v1491
        %v1667 = vunpack.c.h.b16 %v1491
        %v1668 = vunpack.c.l.b16 %v1492
        %v1669 = vunpack.c.h.b16 %v1492
        %v1670 = vunpack.c.l.b16 %v1493
        %v1671 = vunpack.c.h.b16 %v1493
        %v1672 = vunpack.c.l.b16 %v1494
        %v1673 = vunpack.c.h.b16 %v1494
        %v1674 = vunpack.c.l.b16 %v1495
        %v1675 = vunpack.c.h.b16 %v1495
        %v1676 = vunpack.c.l.b16 %v1496
        %v1677 = vunpack.c.h.b16 %v1496
        %v1678 = vunpack.c.l.b16 %v1497
        %v1679 = vunpack.c.h.b16 %v1497
        %v1680 = vunpack.c.l.b16 %v1498
        %v1681 = vunpack.c.h.b16 %v1498
        %v1682 = vunpack.c.l.b16 %v1499
        %v1683 = vunpack.c.h.b16 %v1499
        %v1684 = vunpack.c.l.b16 %v1500
        %v1685 = vunpack.c.h.b16 %v1500
        %v1686 = vunpack.c.l.b16 %v1501
        %v1687 = vunpack.c.h.b16 %v1501
        %v1688 = vunpack.c.l.b16 %v1502
        %v1689 = vunpack.c.h.b16 %v1502
        %v1690 = vunpack.c.l.b16 %v1503
        %v1691 = vunpack.c.h.b16 %v1503
        %v1692 = vunpack.c.l.b16 %v1504
        %v1693 = vunpack.c.h.b16 %v1504
        %v1694 = vunpack.c.l.b16 %v1505
        %v1695 = vunpack.c.h.b16 %v1505
        %v1696 = vunpack.c.l.b16 %v1506
        %v1697 = vunpack.c.h.b16 %v1506
        %v1698 = vunpack.c.l.b16 %v1507
        %v1699 = vunpack.c.h.b16 %v1507
        %v1700 = vunpack.c.l.b16 %v1508
        %v1701 = vunpack.c.h.b16 %v1508
        %v1702 = vunpack.c.l.b16 %v1509
        %v1703 = vunpack.c.h.b16 %v1509
        %v1704 = vunpack.c.l.b16 %v1510
        %v1705 = vunpack.c.h.b16 %v1510
        %v1706 = vunpack.c.l.b16 %v1511
        %v1707 = vunpack.c.h.b16 %v1511
        %v1708 = vunpack.c.l.b16 %v1512
        %v1709 = vunpack.c.h.b16 %v1512
        %v1710 = vunpack.c.l.b16 %v1513
        %v1711 = vunpack.c.h.b16 %v1513
        %v1712 = vunpack.c.l.b16 %v1514
        %v1713 = vunpack.c.h.b16 %v1514
        %v1714 = vunpack.c.l.b16 %v1515
        %v1715 = vunpack.c.h.b16 %v1515
        %v1716 = vunpack.c.l.b16 %v1516
        %v1717 = vunpack.c.h.b16 %v1516
        %v1718 = vunpack.c.l.b16 %v1517
        %v1719 = vunpack.c.h.b16 %v1517
        %v1720 = vpack.c.b16 %v1596, %v1592
        %v1721 = vpack.c.b16 %v1597, %v1593
        %v1722 = vpack.c.b16 %v1598, %v1594
        %v1723 = vpack.c.b16 %v1599, %v1595
        %v1724 = vpack.c.b16 %v1604, %v1600
        %v1725 = vpack.c.b16 %v1605, %v1601
        %v1726 = vpack.c.b16 %v1606, %v1602
        %v1727 = vpack.c.b16 %v1607, %v1603
        %v1728 = vpack.c.b16 %v1612, %v1608
        %v1729 = vpack.c.b16 %v1613, %v1609
        %v1730 = vpack.c.b16 %v1614, %v1610
        %v1731 = vpack.c.b16 %v1615, %v1611
        %v1732 = vpack.c.b16 %v1620, %v1616
        %v1733 = vpack.c.b16 %v1621, %v1617
        %v1734 = vpack.c.b16 %v1622, %v1618
        %v1735 = vpack.c.b16 %v1623, %v1619
        %v1736 = vpack.c.b16 %v1628, %v1624
        %v1737 = vpack.c.b16 %v1629, %v1625
        %v1738 = vpack.c.b16 %v1630, %v1626
        %v1739 = vpack.c.b16 %v1631, %v1627
        %v1740 = vpack.c.b16 %v1636, %v1632
        %v1741 = vpack.c.b16 %v1637, %v1633
        %v1742 = vpack.c.b16 %v1638, %v1634
        %v1743 = vpack.c.b16 %v1639, %v1635
        %v1744 = vpack.c.b16 %v1644, %v1640
        %v1745 = vpack.c.b16 %v1645, %v1641
        %v1746 = vpack.c.b16 %v1646, %v1642
        %v1747 = vpack.c.b16 %v1647, %v1643
        %v1748 = vpack.c.b16 %v1652, %v1648
        %v1749 = vpack.c.b16 %v1653, %v1649
        %v1750 = vpack.c.b16 %v1654, %v1650
        %v1751 = vpack.c.b16 %v1655, %v1651
        %v1752 = vpack.c.b16 %v1660, %v1656
        %v1753 = vpack.c.b16 %v1661, %v1657
        %v1754 = vpack.c.b16 %v1662, %v1658
        %v1755 = vpack.c.b16 %v1663, %v1659
        %v1756 = vpack.c.b16 %v1668, %v1664
        %v1757 = vpack.c.b16 %v1669, %v1665
        %v1758 = vpack.c.b16 %v1670, %v1666
        %v1759 = vpack.c.b16 %v1671, %v1667
        %v1760 = vpack.c.b16 %v1676, %v1672
        %v1761 = vpack.c.b16 %v1677, %v1673
        %v1762 = vpack.c.b16 %v1678, %v1674
        %v1763 = vpack.c.b16 %v1679, %v1675
        %v1764 = vpack.c.b16 %v1684, %v1680
        %v1765 = vpack.c.b16 %v1685, %v1681
        %v1766 = vpack.c.b16 %v1686, %v1682
        %v1767 = vpack.c.b16 %v1687, %v1683
        %v1768 = vpack.c.b16 %v1692, %v1688
        %v1769 = vpack.c.b16 %v1693, %v1689
        %v1770 = vpack.c.b16 %v1694, %v1690
        %v1771 = vpack.c.b16 %v1695, %v1691
        %v1772 = vpack.c.b16 %v1700, %v1696
        %v1773 = vpack.c.b16 %v1701, %v1697
        %v1774 = vpack.c.b16 %v1702, %v1698
        %v1775 = vpack.c.b16 %v1703, %v1699
        %v1776 = vpack.c.b16 %v1708, %v1704
        %v1777 = vpack.c.b16 %v1709, %v1705
        %v1778 = vpack.c.b16 %v1710, %v1706
        %v1779 = vpack.c.b16 %v1711, %v1707
        %v1780 = vpack.c.b16 %v1716, %v1712
        %v1781 = vpack.c.b16 %v1717, %v1713
        %v1782 = vpack.c.b16 %v1718, %v1714
        %v1783 = vpack.c.b16 %v1719, %v1715
        %1848 = vmatpush.bf16.msra.mxu0 %v1748
        %1849 = vmatpush.bf16.msra.mxu0 %v1744
        %1850 = vmatpush.bf16.msra.mxu0 %v1740
        %1851 = vmatpush.bf16.msra.mxu0 %v1736
        %1852 = vmatpush.bf16.msra.mxu0 %v1732
        %1853 = vmatpush.bf16.msra.mxu0 %v1728
        %1854 = vmatpush.bf16.msra.mxu0 %v1724
        %1855 = vmatpush.bf16.msra.mxu0 %v1720
        %1856 = vmatmul.bf16.gmra.mxu0 %v1450
        %v1857 = vpop.f32.mrf.mxu0
        %v1858 = vadd.f32 %v1520, %v1857
        %v1859 = vpop.f32.mrf.mxu0
        %v1860 = vadd.f32 %v1520, %v1859
        %1861 = vmatmul.bf16.gmra.mxu0 %v1452
        %v1862 = vpop.f32.mrf.mxu0
        %v1863 = vadd.f32 %v1520, %v1862
        %v1864 = vpop.f32.mrf.mxu0
        %v1865 = vadd.f32 %v1520, %v1864
        %1866 = vdwg.mxu0
        %1867 = vmatpush.bf16.msra.mxu0 %v1780
        %1868 = vmatpush.bf16.msra.mxu0 %v1776
        %1869 = vmatpush.bf16.msra.mxu0 %v1772
        %1870 = vmatpush.bf16.msra.mxu0 %v1768
        %1871 = vmatpush.bf16.msra.mxu0 %v1764
        %1872 = vmatpush.bf16.msra.mxu0 %v1760
        %1873 = vmatpush.bf16.msra.mxu0 %v1756
        %1874 = vmatpush.bf16.msra.mxu0 %v1752
        %1875 = vmatmul.bf16.gmra.mxu0 %v1451
        %v1876 = vpop.f32.mrf.mxu0
        %v1877 = vadd.f32 %v1858, %v1876
        %v1878 = vpop.f32.mrf.mxu0
        %v1879 = vadd.f32 %v1860, %v1878
        %1880 = vmatmul.bf16.gmra.mxu0 %v1453
        %v1881 = vpop.f32.mrf.mxu0
        %v1882 = vadd.f32 %v1863, %v1881
        %v1883 = vpop.f32.mrf.mxu0
        %v1884 = vadd.f32 %v1865, %v1883
        %1885 = vdwg.mxu0
        %1886 = vmatpush.bf16.msra.mxu0 %v1749
        %1887 = vmatpush.bf16.msra.mxu0 %v1745
        %1888 = vmatpush.bf16.msra.mxu0 %v1741
        %1889 = vmatpush.bf16.msra.mxu0 %v1737
        %1890 = vmatpush.bf16.msra.mxu0 %v1733
        %1891 = vmatpush.bf16.msra.mxu0 %v1729
        %1892 = vmatpush.bf16.msra.mxu0 %v1725
        %1893 = vmatpush.bf16.msra.mxu0 %v1721
        %1894 = vmatmul.bf16.gmra.mxu0 %v1450
        %v1895 = vpop.f32.mrf.mxu0
        %v1896 = vadd.f32 %v1521, %v1895
        %v1897 = vpop.f32.mrf.mxu0
        %v1898 = vadd.f32 %v1521, %v1897
        %1899 = vmatmul.bf16.gmra.mxu0 %v1452
        %v1900 = vpop.f32.mrf.mxu0
        %v1901 = vadd.f32 %v1521, %v1900
        %v1902 = vpop.f32.mrf.mxu0
        %v1903 = vadd.f32 %v1521, %v1902
        %1904 = vdwg.mxu0
        %1905 = vmatpush.bf16.msra.mxu0 %v1781
        %1906 = vmatpush.bf16.msra.mxu0 %v1777
        %1907 = vmatpush.bf16.msra.mxu0 %v1773
        %1908 = vmatpush.bf16.msra.mxu0 %v1769
        %1909 = vmatpush.bf16.msra.mxu0 %v1765
        %1910 = vmatpush.bf16.msra.mxu0 %v1761
        %1911 = vmatpush.bf16.msra.mxu0 %v1757
        %1912 = vmatpush.bf16.msra.mxu0 %v1753
        %1913 = vmatmul.bf16.gmra.mxu0 %v1451
        %v1914 = vpop.f32.mrf.mxu0
        %v1915 = vadd.f32 %v1896, %v1914
        %v1916 = vpop.f32.mrf.mxu0
        %v1917 = vadd.f32 %v1898, %v1916
        %1918 = vmatmul.bf16.gmra.mxu0 %v1453
        %v1919 = vpop.f32.mrf.mxu0
        %v1920 = vadd.f32 %v1901, %v1919
        %v1921 = vpop.f32.mrf.mxu0
        %v1922 = vadd.f32 %v1903, %v1921
        %1923 = vdwg.mxu0
        %1924 = vmatpush.bf16.msra.mxu0 %v1750
        %1925 = vmatpush.bf16.msra.mxu0 %v1746
        %1926 = vmatpush.bf16.msra.mxu0 %v1742
        %1927 = vmatpush.bf16.msra.mxu0 %v1738
        %1928 = vmatpush.bf16.msra.mxu0 %v1734
        %1929 = vmatpush.bf16.msra.mxu0 %v1730
        %1930 = vmatpush.bf16.msra.mxu0 %v1726
        %1931 = vmatpush.bf16.msra.mxu0 %v1722
        %1932 = vmatmul.bf16.gmra.mxu0 %v1450
        %v1933 = vpop.f32.mrf.mxu0
        %v1934 = vadd.f32 %v1522, %v1933
        %v1935 = vpop.f32.mrf.mxu0
        %v1936 = vadd.f32 %v1522, %v1935
        %1937 = vmatmul.bf16.gmra.mxu0 %v1452
        %v1938 = vpop.f32.mrf.mxu0
        %v1939 = vadd.f32 %v1522, %v1938
        %v1940 = vpop.f32.mrf.mxu0
        %v1941 = vadd.f32 %v1522, %v1940
        %1942 = vdwg.mxu0
        %1943 = vmatpush.bf16.msra.mxu0 %v1782
        %1944 = vmatpush.bf16.msra.mxu0 %v1778
        %1945 = vmatpush.bf16.msra.mxu0 %v1774
        %1946 = vmatpush.bf16.msra.mxu0 %v1770
        %1947 = vmatpush.bf16.msra.mxu0 %v1766
        %1948 = vmatpush.bf16.msra.mxu0 %v1762
        %1949 = vmatpush.bf16.msra.mxu0 %v1758
        %1950 = vmatpush.bf16.msra.mxu0 %v1754
        %1951 = vmatmul.bf16.gmra.mxu0 %v1451
        %v1952 = vpop.f32.mrf.mxu0
        %v1953 = vadd.f32 %v1934, %v1952
        %v1954 = vpop.f32.mrf.mxu0
        %v1955 = vadd.f32 %v1936, %v1954
        %1956 = vmatmul.bf16.gmra.mxu0 %v1453
        %v1957 = vpop.f32.mrf.mxu0
        %v1958 = vadd.f32 %v1939, %v1957
        %v1959 = vpop.f32.mrf.mxu0
        %v1960 = vadd.f32 %v1941, %v1959
        %1961 = vdwg.mxu0
        %1962 = vmatpush.bf16.msra.mxu0 %v1751
        %1963 = vmatpush.bf16.msra.mxu0 %v1747
        %1964 = vmatpush.bf16.msra.mxu0 %v1743
        %1965 = vmatpush.bf16.msra.mxu0 %v1739
        %1966 = vmatpush.bf16.msra.mxu0 %v1735
        %1967 = vmatpush.bf16.msra.mxu0 %v1731
        %1968 = vmatpush.bf16.msra.mxu0 %v1727
        %1969 = vmatpush.bf16.msra.mxu0 %v1723
        %1970 = vmatmul.bf16.gmra.mxu0 %v1450
        %v1971 = vpop.f32.mrf.mxu0
        %v1972 = vadd.f32 %v1523, %v1971
        %v1973 = vpop.f32.mrf.mxu0
        %v1974 = vadd.f32 %v1523, %v1973
        %1975 = vmatmul.bf16.gmra.mxu0 %v1452
        %v1976 = vpop.f32.mrf.mxu0
        %v1977 = vadd.f32 %v1523, %v1976
        %v1978 = vpop.f32.mrf.mxu0
        %v1979 = vadd.f32 %v1523, %v1978
        %1980 = vdwg.mxu0
        %1981 = vmatpush.bf16.msra.mxu0 %v1783
        %1982 = vmatpush.bf16.msra.mxu0 %v1779
        %1983 = vmatpush.bf16.msra.mxu0 %v1775
        %1984 = vmatpush.bf16.msra.mxu0 %v1771
        %1985 = vmatpush.bf16.msra.mxu0 %v1767
        %1986 = vmatpush.bf16.msra.mxu0 %v1763
        %1987 = vmatpush.bf16.msra.mxu0 %v1759
        %1988 = vmatpush.bf16.msra.mxu0 %v1755
        %1989 = vmatmul.bf16.gmra.mxu0 %v1451
        %v1990 = vpop.f32.mrf.mxu0
        %v1991 = vadd.f32 %v1972, %v1990
        %v1992 = vpop.f32.mrf.mxu0
        %v1993 = vadd.f32 %v1974, %v1992
        %1994 = vmatmul.bf16.gmra.mxu0 %v1453
        %v1995 = vpop.f32.mrf.mxu0
        %v1996 = vadd.f32 %v1977, %v1995
        %v1997 = vpop.f32.mrf.mxu0
        %v1998 = vadd.f32 %v1979, %v1997
        %1999 = vdwg.mxu0
        %2000 = vst [vmem:[%s459] sm:$0xff] %v1877
        %2001 = vst [vmem:[%s459 + $0x8] sm:$0xff] %v1915
        %2002 = vst [vmem:[%s459 + $0x10] sm:$0xff] %v1953
        %2003 = vst [vmem:[%s459 + $0x18] sm:$0xff] %v1991
        %2004 = vst [vmem:[%s459 + $0x20] sm:$0xff] %v1879
        %2005 = vst [vmem:[%s459 + $0x28] sm:$0xff] %v1917
        %2006 = vst [vmem:[%s459 + $0x30] sm:$0xff] %v1955
        %2007 = vst [vmem:[%s459 + $0x38] sm:$0xff] %v1993
        %2008 = vst [vmem:[%s459 + $0x40] sm:$0xff] %v1882
        %2009 = vst [vmem:[%s459 + $0x48] sm:$0xff] %v1920
        %2010 = vst [vmem:[%s459 + $0x50] sm:$0xff] %v1958
        %2011 = vst [vmem:[%s459 + $0x58] sm:$0xff] %v1996
        %2012 = vst [vmem:[%s459 + $0x60] sm:$0xff] %v1884
        %2013 = vst [vmem:[%s459 + $0x68] sm:$0xff] %v1922
        %2014 = vst [vmem:[%s459 + $0x70] sm:$0xff] %v1960
        %2015 = vst [vmem:[%s459 + $0x78] sm:$0xff] %v1998
        %s2016 = sand.u32 %s272, 1
        %s2017 = scalar_lea.sflag [#allocation4], %s2016
        %s2018 = sand.u32 %s272, 1
        %s2019 = smul.addr %s2018, 128
        %s2020 = scalar_lea.vmem [#allocation11], %s2019
        // Predicated region
        $region85: #{tpu_custom_call.1} parent=63 // pred_check
          %p2021 = pneg %p282
        $region86: #{tpu_custom_call.1} parent=63 // pred_check_branch
          %2023 = sbr.rel (%p2021) target = $region88
        $region87: #{tpu_custom_call.1} parent=63 // pred_region
          %s2024 = smul.u32 4, %s28
          %2026 = vsyncadd %s2017, 0
          %s2027 = smul.addr %s2024, 4
          %s2028 = smul.addr %s2027, 8
          %s2029 = scalar_lea.hbm %s11, %s2028
          %s2030 = sshll.u32 %s2020, 4
          %s2031 = int_to_ptr.vmem [resolvable:$true] %s2030
          %s2032 = sshll.u32 %s2029, 4
          %s2033 = int_to_ptr.hbm [resolvable:$true] %s2032
          %2038 = dma.vmem_to_hbm [thread:$0]  %s2031, 2048, %s2033, %s2017, 512, 512, 32
        $region88: #{tpu_custom_call.1} parent=63 // pred_fallthru
          _
      $region64: #{tpu_custom_call.1} parent=5 // pred_fallthru
        _
      %p2039 = scmp.le.s32.totalorder 2, %s23
      // Predicated region
      $region89: #{tpu_custom_call.1} parent=5 // pred_check
        %p2040 = pneg %p2039
      $region90: #{tpu_custom_call.1} parent=5 // pred_check_branch
        %2042 = sbr.rel (%p2040) target = $region92
      $region91: #{tpu_custom_call.1} parent=5 // pred_region
        %s2043 = ssub.s32 %s23, 2
        // Predicated region
        $region93: #{tpu_custom_call.1} parent=91 // pred_check
          %p2044 = pneg %p288
        $region94: #{tpu_custom_call.1} parent=91 // pred_check_branch
          %2046 = sbr.rel (%p2044) target = $region96
        $region95: #{tpu_custom_call.1} parent=91 // pred_region
          %s2047 = sand.u32 %s273, 1
          %s2048 = scalar_lea.sflag [#allocation4], %s2047
          %s2049 = sand.u32 %s273, 1
          %s2050 = smul.addr %s2049, 128
          %s2051 = scalar_lea.vmem [#allocation11], %s2050
          %2053 = dma.done %s2048, 2048
        $region96: #{tpu_custom_call.1} parent=91 // pred_fallthru
          _
      $region92: #{tpu_custom_call.1} parent=5 // pred_fallthru
        _
    $region6: #{tpu_custom_call.1} parent=1 // loop_footer
      %s27 = sadd.s32 1, %s23
    $region7: #{tpu_custom_call.1} parent=1 // loop_footer_branch
      %22 = sbr.rel target = $region3
    $region8: #{tpu_custom_call.1} parent=1 // loop_exit
      _
    %2054 = vsyncpa [#allocation3], 1
    %s2055 = scalar_lea.sflag [#allocation3], 1
    %2056 = vsyncpa %s2055, 1
    %2057 = vsyncpa [#allocation6], 1
    %2058 = vsyncpa [#allocation9], 1
    %2059 = vsyncpa [#allocation4], 1
    %s2060 = scalar_lea.sflag [#allocation4], 1
    %2061 = vsyncpa %s2060, 1

</llo_original>
